<compile_context>
chip_gen: v5e
topology: v5e:2x2
jax: 0.10.0
libtpu: 0.0.40
codegen_flags: <defaults>
</compile_context>

<pallas_src>
import jax
import jax.numpy as jnp
from jax.experimental import pallas as pl
from jax.experimental.pallas import tpu as pltpu

LANE = 128
NSPLIT = 2  # extra parallel grid axis over row-tiles -> both v7x TensorCores busy at any B
# Deterministic "parameters" of the module: per-task static loss weights.
LOSS_WEIGHTS = {"depth": 1.0, "normal": 1.0, "segmentation": 1.0}


def _mtl_partial_kernel(c_ref, pd_ref, gd_ref, pn_ref, gn_ref, nm_ref, ps_ref, gs_ref, o_ref):
    """Per-(batch, split, row-tile) masked partial sums for the three task losses.

    o_ref rows (each a 128-lane partial-sum vector):
      0: sum of BerHu terms (valid depth)   1: count of valid-depth pixels
      2: sum of (1 - cos) (masked normals)  3: count of masked normal pixels
      4: sum of CE (labelled seg pixels)    5: count of labelled seg pixels
    """
    f32 = jnp.float32
    t = pl.program_id(2)

    # ---------- depth: BerHu (reverse Huber); c and 1/(2c) are SMEM scalars ----------
    c = c_ref[0]
    inv_2c = c_ref[1]
    gd = gd_ref[...].astype(f32)
    pd = pd_ref[...].astype(f32)
    dmask = (gd > 0.0).astype(f32)
    diff = jnp.abs(gd - pd) * dmask          # invalid pixels -> diff == 0 -> linear branch -> 0
    berhu = jnp.where(diff <= c, diff, (diff * diff + c * c) * inv_2c)

    # ---------- normal: 'AL' angular loss, masked mean of (1 - cos) ----------
    pnx = pn_ref[0].astype(f32); pny = pn_ref[1].astype(f32); pnz = pn_ref[2].astype(f32)
    gnx = gn_ref[0].astype(f32); gny = gn_ref[1].astype(f32); gnz = gn_ref[2].astype(f32)
    nmask = nm_ref[...].astype(f32)
    p_rn = jax.lax.rsqrt(pnx * pnx + pny * pny + pnz * pnz + 1e-12)
    g_rn = jax.lax.rsqrt(gnx * gnx + gny * gny + gnz * gnz + 1e-12)
    cos = jnp.clip((pnx * gnx + pny * gny + pnz * gnz) * p_rn * g_rn, -1.0, 1.0)
    # TODO(synk): Normal_loss('AL') source is not provided; using masked mean of (1 - cos)
    #             instead of arccos(cos) (arccos has no clean TPU Mosaic lowering).
    nloss = (1.0 - cos) * nmask

    # ---------- seg: softmax cross-entropy, ignore_index = -1 ----------
    gts = gs_ref[...]                                   # (tile_r, LANE) int32
    smask = (gts >= 0).astype(f32)
    num_classes = ps_ref.shape[0]
    # Pairwise maxima halve the max dependency chain (v7x VALU relief, free elsewhere).
    mx = ps_ref[0].astype(f32)
    cidx = 1
    if num_classes % 2 == 0 and num_classes > 1:
        mx = jnp.maximum(mx, ps_ref[1].astype(f32))
        cidx = 2
    while cidx < num_classes:
        pair = jnp.maximum(ps_ref[cidx].astype(f32), ps_ref[cidx + 1].astype(f32))
        mx = jnp.maximum(mx, pair)
        cidx += 2
    sexp = jnp.zeros_like(mx)
    picked = jnp.zeros_like(mx)
    for k in range(num_classes):                        # fused pass: one reload per class
        lc = ps_ref[k].astype(f32)
        sexp = sexp + jnp.exp(lc - mx)
        picked = picked + jnp.where(gts == k, lc, 0.0)
    ce = (jnp.log(sexp) + mx - picked) * smask

    # ---------- accumulate per-lane partial sums for this tile ----------
    partial = jnp.concatenate(
        [jnp.sum(berhu, axis=0, keepdims=True),
         jnp.sum(dmask, axis=0, keepdims=True),
         jnp.sum(nloss, axis=0, keepdims=True),
         jnp.sum(nmask, axis=0, keepdims=True),
         jnp.sum(ce, axis=0, keepdims=True),
         jnp.sum(smask, axis=0, keepdims=True),
         jnp.zeros((2, LANE), f32)], axis=0)            # (8, LANE)

    @pl.when(t == 0)
    def _():
        o_ref[...] = jnp.zeros_like(o_ref)

    o_ref[...] = o_ref[...] + partial


def _round_up(x, m):
    return ((x + m - 1) // m) * m


def _vmem_capacity_bytes():
    try:
        info = pltpu.get_tpu_info()
        cap = getattr(info, "vmem_capacity_bytes", None)
        if cap:
            return int(cap)
    except Exception:
        pass
    return 64 * 1024 * 1024  # conservative default (v7x per-TensorCore VMEM)


def _pad_rows(x, axis, rows_pad, value):
    extra = rows_pad - x.shape[axis]
    if extra == 0:
        return x
    cfg = [(0, 0)] * x.ndim
    cfg[axis] = (0, extra)
    return jnp.pad(x, cfg, constant_values=value)


def multitask_loss_uncertainty(pred_depth, gt_depth, pred_normal, gt_normal,
                               normal_mask, pred_seg, gt_seg, log_vars):
    B, _, H, W = pred_depth.shape
    C = pred_seg.shape[1]
    assert (H * W) % LANE == 0, "H*W must be a multiple of 128"
    R = (H * W) // LANE

    # Free, contiguous reshapes (no transpose, no dtype upcast): NCHW -> (B, C, rows, 128).
    pd = pred_depth.reshape(B, 1, R, LANE)
    gd = gt_depth.reshape(B, 1, R, LANE)
    pn = pred_normal.reshape(B, 3, R, LANE)
    gn = gt_normal.reshape(B, 3, R, LANE)
    nm = normal_mask.reshape(B, 1, R, LANE)
    ps = pred_seg.reshape(B, C, R, LANE)
    gs = gt_seg.astype(jnp.int32).reshape(B, R, LANE)

    # BerHu global threshold c = 0.2 * max(|gt - pred| over gt > 0) and hoisted 1/(2c):
    # cheap XLA pre-pass over just the two depth planes (fuses into a single reduce),
    # fed to the kernel as two SMEM scalars -> no extra VMEM DMA stream, no in-kernel divide.
    gd32 = gt_depth.astype(jnp.float32)
    pd32 = pred_depth.astype(jnp.float32)
    c_scalar = 0.2 * jnp.max(jnp.abs(gd32 - pd32) * (gd32 > 0.0).astype(jnp.float32))
    c_arr = jnp.stack([c_scalar, 1.0 / (2.0 * c_scalar + 1e-12)]).astype(jnp.float32)

    # ---- Generation-aware tile sizing (v5e/v6e: 128 MiB VMEM; v7x: 64 MiB per TC). ----
    sub_mult = 8
    for arr in (pd, gd, pn, gn, nm, ps, gs):
        sub_mult = max(sub_mult, 32 // jnp.dtype(arr.dtype).itemsize)  # bf16->16, int8->32

    bytes_per_row = LANE * (
        pd.dtype.itemsize + gd.dtype.itemsize
        + 3 * pn.dtype.itemsize + 3 * gn.dtype.itemsize
        + nm.dtype.itemsize + C * ps.dtype.itemsize + gs.dtype.itemsize)

    vmem_cap = _vmem_capacity_bytes()
    if vmem_cap >= 100 * 1024 * 1024:        # v5e / v6e (128 MiB physical VMEM)
        buf_budget, limit_cap = 56 * 1024 * 1024, 100 * 1024 * 1024
    else:                                    # v7x: leave headroom for Mosaic internal scratch
        buf_budget, limit_cap = 24 * 1024 * 1024, 52 * 1024 * 1024

    max_rows = max(sub_mult, buf_budget // (2 * bytes_per_row))
    tile_r = min(max_rows, 512, _round_up(R, sub_mult))
    tile_r = max(sub_mult, (tile_r // sub_mult) * sub_mult)

    # Pad the row axis to a multiple of NSPLIT * tile_r (the masks zero padded rows) instead
    # of divisor hunting (which could degrade to tiny tiles or blow the VMEM budget).
    R_pad = _round_up(R, NSPLIT * tile_r)
    tps = R_pad // (NSPLIT * tile_r)         # row-tiles per split
    if R_pad != R:
        pd = _pad_rows(pd, 2, R_pad, 0)
        gd = _pad_rows(gd, 2, R_pad, 0)      # gt == 0  -> depth mask zero
        pn = _pad_rows(pn, 2, R_pad, 0)
        gn = _pad_rows(gn, 2, R_pad, 0)
        nm = _pad_rows(nm, 2, R_pad, 0)      # mask == 0 -> normal mask zero
        ps = _pad_rows(ps, 2, R_pad, 0)
        gs = _pad_rows(gs, 1, R_pad, -1)     # ignore_index -> seg mask zero

    block_in_bytes = bytes_per_row * tile_r
    vmem_limit = int(min(limit_cap,
                         max(16 * 1024 * 1024, 2 * block_in_bytes + (8 << 20))))

    partials = pl.pallas_call(
        _mtl_partial_kernel,
        out_shape=jax.ShapeDtypeStruct((B, NSPLIT, 8, LANE), jnp.float32),
        grid=(B, NSPLIT, tps),
        in_specs=[
            pl.BlockSpec(memory_space=pltpu.MemorySpace.SMEM),                        # [c, 1/2c]
            pl.BlockSpec((None, None, tile_r, LANE), lambda b, s, t: (b, 0, s * tps + t, 0)),
            pl.BlockSpec((None, None, tile_r, LANE), lambda b, s, t: (b, 0, s * tps + t, 0)),
            pl.BlockSpec((None, 3, tile_r, LANE), lambda b, s, t: (b, 0, s * tps + t, 0)),
            pl.BlockSpec((None, 3, tile_r, LANE), lambda b, s, t: (b, 0, s * tps + t, 0)),
            pl.BlockSpec((None, None, tile_r, LANE), lambda b, s, t: (b, 0, s * tps + t, 0)),
            pl.BlockSpec((None, C, tile_r, LANE), lambda b, s, t: (b, 0, s * tps + t, 0)),
            pl.BlockSpec((None, tile_r, LANE), lambda b, s, t: (b, s * tps + t, 0)),
        ],
        out_specs=pl.BlockSpec((None, None, 8, LANE), lambda b, s, t: (b, s, 0, 0)),
        compiler_params=pltpu.CompilerParams(
            dimension_semantics=("parallel", "parallel", "arbitrary"),
            vmem_limit_bytes=vmem_limit),
    )(c_arr, pd, gd, pn, gn, nm, ps, gs)

    # Tiny final combine (6 scalars) + homoscedastic-uncertainty weighting in XLA.
    sums = jnp.sum(partials, axis=(0, 1, 3))             # (8,)
    depth_loss = sums[0] / jnp.maximum(sums[1], 1.0)
    normal_loss = sums[2] / jnp.maximum(sums[3], 1.0)
    seg_loss = sums[4] / jnp.maximum(sums[5], 1.0)

    lv = log_vars.astype(jnp.float32)
    loss_d = LOSS_WEIGHTS["depth"] * jnp.exp(-lv[0]) * 10.0 * depth_loss + lv[0]
    loss_n = LOSS_WEIGHTS["normal"] * jnp.exp(-lv[1]) * 10.0 * normal_loss + lv[1]
    loss_s = LOSS_WEIGHTS["segmentation"] * jnp.exp(-lv[2]) * 10.0 * seg_loss + lv[2]
    return loss_d + loss_n + loss_s


def _reference(pred_depth, gt_depth, pred_normal, gt_normal, normal_mask,
               pred_seg, gt_seg, log_vars):
    # pure-jnp reference mirroring the kernel math (for a sanity check).
    gd = gt_depth.astype(jnp.float32)
    pd = pred_depth.astype(jnp.float32)
    dmask = (gd > 0.0).astype(jnp.float32)
    diff = jnp.abs(gd - pd) * dmask
    c = 0.2 * jnp.max(diff)
    berhu = jnp.where(diff <= c, diff, (diff * diff + c * c) / (2.0 * c + 1e-12))
    depth_loss = jnp.sum(berhu * dmask) / jnp.maximum(jnp.sum(dmask), 1.0)

    pn = pred_normal.astype(jnp.float32)
    gn = gt_normal.astype(jnp.float32)
    nm = normal_mask.astype(jnp.float32)[:, 0]
    pn = pn * jax.lax.rsqrt(jnp.sum(pn * pn, axis=1, keepdims=True) + 1e-12)
    gn = gn * jax.lax.rsqrt(jnp.sum(gn * gn, axis=1, keepdims=True) + 1e-12)
    cos = jnp.clip(jnp.sum(pn * gn, axis=1), -1.0, 1.0)
    normal_loss = jnp.sum((1.0 - cos) * nm) / jnp.maximum(jnp.sum(nm), 1.0)

    logits = pred_seg.astype(jnp.float32)
    gts = gt_seg.astype(jnp.int32)
    smask = (gts >= 0).astype(jnp.float32)
    mx = jnp.max(logits, axis=1)
    lse = jnp.log(jnp.sum(jnp.exp(logits - mx[:, None]), axis=1)) + mx
    picked = jnp.take_along_axis(logits, jnp.maximum(gts, 0)[:, None], axis=1)[:, 0]
    ce = (lse - picked) * smask
    seg_loss = jnp.sum(ce) / jnp.maximum(jnp.sum(smask), 1.0)

    lv = log_vars.astype(jnp.float32)
    loss_d = LOSS_WEIGHTS["depth"] * jnp.exp(-lv[0]) * 10.0 * depth_loss + lv[0]
    loss_n = LOSS_WEIGHTS["normal"] * jnp.exp(-lv[1]) * 10.0 * normal_loss + lv[1]
    loss_s = LOSS_WEIGHTS["segmentation"] * jnp.exp(-lv[2]) * 10.0 * seg_loss + lv[2]
    return loss_d + loss_n + loss_s


if __name__ == "__main__":
    key = jax.random.PRNGKey(0)
    B, H, W, NCLS = 2, 16, 16, 8
    ks = jax.random.split(key, 8)
    bf16 = jnp.bfloat16

    # Narrow HBM dtypes (bf16 images / masks, int32 labels); kernel upcasts per tile.
    pred_depth = jax.random.uniform(ks[0], (B, 1, H, W), jnp.float32, 0.1, 10.0).astype(bf16)
    gt_depth = jax.random.uniform(ks[1], (B, 1, H, W), jnp.float32, 0.0, 10.0)
    gt_depth = jnp.where(gt_depth < 1.0, 0.0, gt_depth).astype(bf16)   # invalid-depth holes
    pred_normal = jax.random.normal(ks[2], (B, 3, H, W), jnp.float32).astype(bf16)
    gt_normal = jax.random.normal(ks[3], (B, 3, H, W), jnp.float32).astype(bf16)
    normal_mask = (jax.random.uniform(ks[4], (B, 1, H, W)) > 0.2).astype(bf16)
    pred_seg = jax.random.normal(ks[5], (B, NCLS, H, W), jnp.float32).astype(bf16)
    gt_seg = jax.random.randint(ks[6], (B, H, W), 0, NCLS)
    gt_seg = jnp.where(jax.random.uniform(ks[7], (B, H, W)) < 0.05, -1, gt_seg)
    log_vars = jnp.array([0.1, -0.2, 0.3], jnp.float32)                # deterministic params

    total = multitask_loss_uncertainty(pred_depth, gt_depth, pred_normal, gt_normal,
                                       normal_mask, pred_seg, gt_seg, log_vars)
    total = jax.block_until_ready(total)

    ref = _reference(pred_depth, gt_depth, pred_normal, gt_normal,
                     normal_mask, pred_seg, gt_seg, log_vars)
    assert bool(jnp.isfinite(total)), "non-finite kernel output"
    assert abs(float(total) - float(ref)) <= 2e-3 * max(1.0, abs(float(ref))), \
        f"mismatch: kernel={float(total)} ref={float(ref)}"
    print("KERNEL_OK")
</pallas_src>

<mosaic_0001>
module attributes {stable_mosaic.version = 11 : i64} {
  func.func @_mtl_partial_kernel(%arg0: i32, %arg1: i32, %arg2: i32, %arg3: memref<2xf32, #tpu.memory_space<smem>>, %arg4: memref<1x1x16x128xbf16, #tpu.memory_space<vmem>>, %arg5: memref<1x1x16x128xbf16, #tpu.memory_space<vmem>>, %arg6: memref<1x3x16x128xbf16, #tpu.memory_space<vmem>>, %arg7: memref<1x3x16x128xbf16, #tpu.memory_space<vmem>>, %arg8: memref<1x1x16x128xbf16, #tpu.memory_space<vmem>>, %arg9: memref<1x8x16x128xbf16, #tpu.memory_space<vmem>>, %arg10: memref<1x16x128xi32, #tpu.memory_space<vmem>>, %arg11: memref<1x1x8x128xf32, #tpu.memory_space<vmem>>) attributes {dimension_semantics = [#tpu.dimension_semantics<parallel>, #tpu.dimension_semantics<parallel>, #tpu.dimension_semantics<arbitrary>], iteration_bounds = array<i64: 2, 2, 1>, scalar_prefetch = 0 : i64, scratch_operands = 0 : i64, tpu.core_type = #tpu.core_type<tc>, window_params = [{transform_indices = @transform_0, window_bounds = array<i64: 2>}, {transform_indices = @transform_1, window_bounds = array<i64: 1, 1, 16, 128>}, {transform_indices = @transform_2, window_bounds = array<i64: 1, 1, 16, 128>}, {transform_indices = @transform_3, window_bounds = array<i64: 1, 3, 16, 128>}, {transform_indices = @transform_4, window_bounds = array<i64: 1, 3, 16, 128>}, {transform_indices = @transform_5, window_bounds = array<i64: 1, 1, 16, 128>}, {transform_indices = @transform_6, window_bounds = array<i64: 1, 8, 16, 128>}, {transform_indices = @transform_7, window_bounds = array<i64: 1, 16, 128>}, {transform_indices = @transform_8, window_bounds = array<i64: 1, 1, 8, 128>}]} {
    %c0 = arith.constant 0 : index
    %0 = memref.load %arg3[%c0] : memref<2xf32, #tpu.memory_space<smem>>
    %c1 = arith.constant 1 : index
    %1 = memref.load %arg3[%c1] : memref<2xf32, #tpu.memory_space<smem>>
    %c0_0 = arith.constant 0 : index
    %c0_1 = arith.constant 0 : index
    %c0_2 = arith.constant 0 : index
    %c0_3 = arith.constant 0 : index
    %2 = vector.load %arg5[%c0_0, %c0_1, %c0_2, %c0_3] : memref<1x1x16x128xbf16, #tpu.memory_space<vmem>>, vector<1x1x16x128xbf16>
    %3 = vector.shape_cast %2 : vector<1x1x16x128xbf16> to vector<16x128xbf16>
    %4 = arith.extf %3 : vector<16x128xbf16> to vector<16x128xf32>
    %c0_4 = arith.constant 0 : index
    %c0_5 = arith.constant 0 : index
    %c0_6 = arith.constant 0 : index
    %c0_7 = arith.constant 0 : index
    %5 = vector.load %arg4[%c0_4, %c0_5, %c0_6, %c0_7] : memref<1x1x16x128xbf16, #tpu.memory_space<vmem>>, vector<1x1x16x128xbf16>
    %6 = vector.shape_cast %5 : vector<1x1x16x128xbf16> to vector<16x128xbf16>
    %7 = arith.extf %6 : vector<16x128xbf16> to vector<16x128xf32>
    %cst = arith.constant 0.000000e+00 : f32
    %8 = vector.broadcast %cst : f32 to vector<16x128xf32>
    %9 = arith.cmpf ogt, %4, %8 : vector<16x128xf32>
    %10 = arith.extui %9 : vector<16x128xi1> to vector<16x128xi32>
    %11 = arith.sitofp %10 : vector<16x128xi32> to vector<16x128xf32>
    %12 = arith.subf %4, %7 : vector<16x128xf32>
    %13 = math.absf %12 : vector<16x128xf32>
    %14 = arith.mulf %13, %11 : vector<16x128xf32>
    %15 = vector.broadcast %0 : f32 to vector<16x128xf32>
    %16 = arith.cmpf ole, %14, %15 : vector<16x128xf32>
    %17 = arith.mulf %14, %14 : vector<16x128xf32>
    %18 = arith.mulf %0, %0 : f32
    %19 = vector.broadcast %18 : f32 to vector<16x128xf32>
    %20 = arith.addf %17, %19 : vector<16x128xf32>
    %21 = vector.broadcast %1 : f32 to vector<16x128xf32>
    %22 = arith.mulf %20, %21 : vector<16x128xf32>
    %23 = arith.select %16, %14, %22 : vector<16x128xi1>, vector<16x128xf32>
    %c0_8 = arith.constant 0 : index
    %c0_9 = arith.constant 0 : index
    %c0_10 = arith.constant 0 : index
    %c0_11 = arith.constant 0 : index
    %24 = vector.load %arg6[%c0_8, %c0_9, %c0_10, %c0_11] : memref<1x3x16x128xbf16, #tpu.memory_space<vmem>>, vector<1x1x16x128xbf16>
    %25 = vector.shape_cast %24 : vector<1x1x16x128xbf16> to vector<16x128xbf16>
    %26 = arith.extf %25 : vector<16x128xbf16> to vector<16x128xf32>
    %c0_12 = arith.constant 0 : index
    %c1_13 = arith.constant 1 : index
    %c0_14 = arith.constant 0 : index
    %c0_15 = arith.constant 0 : index
    %27 = vector.load %arg6[%c0_12, %c1_13, %c0_14, %c0_15] : memref<1x3x16x128xbf16, #tpu.memory_space<vmem>>, vector<1x1x16x128xbf16>
    %28 = vector.shape_cast %27 : vector<1x1x16x128xbf16> to vector<16x128xbf16>
    %29 = arith.extf %28 : vector<16x128xbf16> to vector<16x128xf32>
    %c0_16 = arith.constant 0 : index
    %c2 = arith.constant 2 : index
    %c0_17 = arith.constant 0 : index
    %c0_18 = arith.constant 0 : index
    %30 = vector.load %arg6[%c0_16, %c2, %c0_17, %c0_18] : memref<1x3x16x128xbf16, #tpu.memory_space<vmem>>, vector<1x1x16x128xbf16>
    %31 = vector.shape_cast %30 : vector<1x1x16x128xbf16> to vector<16x128xbf16>
    %32 = arith.extf %31 : vector<16x128xbf16> to vector<16x128xf32>
    %c0_19 = arith.constant 0 : index
    %c0_20 = arith.constant 0 : index
    %c0_21 = arith.constant 0 : index
    %c0_22 = arith.constant 0 : index
    %33 = vector.load %arg7[%c0_19, %c0_20, %c0_21, %c0_22] : memref<1x3x16x128xbf16, #tpu.memory_space<vmem>>, vector<1x1x16x128xbf16>
    %34 = vector.shape_cast %33 : vector<1x1x16x128xbf16> to vector<16x128xbf16>
    %35 = arith.extf %34 : vector<16x128xbf16> to vector<16x128xf32>
    %c0_23 = arith.constant 0 : index
    %c1_24 = arith.constant 1 : index
    %c0_25 = arith.constant 0 : index
    %c0_26 = arith.constant 0 : index
    %36 = vector.load %arg7[%c0_23, %c1_24, %c0_25, %c0_26] : memref<1x3x16x128xbf16, #tpu.memory_space<vmem>>, vector<1x1x16x128xbf16>
    %37 = vector.shape_cast %36 : vector<1x1x16x128xbf16> to vector<16x128xbf16>
    %38 = arith.extf %37 : vector<16x128xbf16> to vector<16x128xf32>
    %c0_27 = arith.constant 0 : index
    %c2_28 = arith.constant 2 : index
    %c0_29 = arith.constant 0 : index
    %c0_30 = arith.constant 0 : index
    %39 = vector.load %arg7[%c0_27, %c2_28, %c0_29, %c0_30] : memref<1x3x16x128xbf16, #tpu.memory_space<vmem>>, vector<1x1x16x128xbf16>
    %40 = vector.shape_cast %39 : vector<1x1x16x128xbf16> to vector<16x128xbf16>
    %41 = arith.extf %40 : vector<16x128xbf16> to vector<16x128xf32>
    %c0_31 = arith.constant 0 : index
    %c0_32 = arith.constant 0 : index
    %c0_33 = arith.constant 0 : index
    %c0_34 = arith.constant 0 : index
    %42 = vector.load %arg8[%c0_31, %c0_32, %c0_33, %c0_34] : memref<1x1x16x128xbf16, #tpu.memory_space<vmem>>, vector<1x1x16x128xbf16>
    %43 = vector.shape_cast %42 : vector<1x1x16x128xbf16> to vector<16x128xbf16>
    %44 = arith.extf %43 : vector<16x128xbf16> to vector<16x128xf32>
    %45 = arith.mulf %26, %26 : vector<16x128xf32>
    %46 = arith.mulf %29, %29 : vector<16x128xf32>
    %47 = arith.addf %45, %46 : vector<16x128xf32>
    %48 = arith.mulf %32, %32 : vector<16x128xf32>
    %49 = arith.addf %47, %48 : vector<16x128xf32>
    %cst_35 = arith.constant 9.99999996E-13 : f32
    %50 = vector.broadcast %cst_35 : f32 to vector<16x128xf32>
    %51 = arith.addf %49, %50 : vector<16x128xf32>
    %52 = math.rsqrt %51 : vector<16x128xf32>
    %53 = arith.mulf %35, %35 : vector<16x128xf32>
    %54 = arith.mulf %38, %38 : vector<16x128xf32>
    %55 = arith.addf %53, %54 : vector<16x128xf32>
    %56 = arith.mulf %41, %41 : vector<16x128xf32>
    %57 = arith.addf %55, %56 : vector<16x128xf32>
    %cst_36 = arith.constant 9.99999996E-13 : f32
    %58 = vector.broadcast %cst_36 : f32 to vector<16x128xf32>
    %59 = arith.addf %57, %58 : vector<16x128xf32>
    %60 = math.rsqrt %59 : vector<16x128xf32>
    %61 = arith.mulf %26, %35 : vector<16x128xf32>
    %62 = arith.mulf %29, %38 : vector<16x128xf32>
    %63 = arith.addf %61, %62 : vector<16x128xf32>
    %64 = arith.mulf %32, %41 : vector<16x128xf32>
    %65 = arith.addf %63, %64 : vector<16x128xf32>
    %66 = arith.mulf %65, %52 : vector<16x128xf32>
    %67 = arith.mulf %66, %60 : vector<16x128xf32>
    %cst_37 = arith.constant -1.000000e+00 : f32
    %cst_38 = arith.constant 1.000000e+00 : f32
    %68 = vector.broadcast %cst_37 : f32 to vector<16x128xf32>
    %69 = arith.maximumf %68, %67 : vector<16x128xf32>
    %70 = vector.broadcast %cst_38 : f32 to vector<16x128xf32>
    %71 = arith.minimumf %70, %69 : vector<16x128xf32>
    %cst_39 = arith.constant 1.000000e+00 : f32
    %72 = vector.broadcast %cst_39 : f32 to vector<16x128xf32>
    %73 = arith.subf %72, %71 : vector<16x128xf32>
    %74 = arith.mulf %73, %44 : vector<16x128xf32>
    %c0_40 = arith.constant 0 : index
    %c0_41 = arith.constant 0 : index
    %c0_42 = arith.constant 0 : index
    %75 = vector.load %arg10[%c0_40, %c0_41, %c0_42] : memref<1x16x128xi32, #tpu.memory_space<vmem>>, vector<1x16x128xi32>
    %76 = vector.shape_cast %75 : vector<1x16x128xi32> to vector<16x128xi32>
    %c0_i32 = arith.constant 0 : i32
    %77 = vector.broadcast %c0_i32 : i32 to vector<16x128xi32>
    %78 = arith.cmpi sge, %76, %77 : vector<16x128xi32>
    %79 = arith.extui %78 : vector<16x128xi1> to vector<16x128xi32>
    %80 = arith.sitofp %79 : vector<16x128xi32> to vector<16x128xf32>
    %c0_43 = arith.constant 0 : index
    %c0_44 = arith.constant 0 : index
    %c0_45 = arith.constant 0 : index
    %c0_46 = arith.constant 0 : index
    %81 = vector.load %arg9[%c0_43, %c0_44, %c0_45, %c0_46] : memref<1x8x16x128xbf16, #tpu.memory_space<vmem>>, vector<1x1x16x128xbf16>
    %82 = vector.shape_cast %81 : vector<1x1x16x128xbf16> to vector<16x128xbf16>
    %83 = arith.extf %82 : vector<16x128xbf16> to vector<16x128xf32>
    %c0_47 = arith.constant 0 : index
    %c1_48 = arith.constant 1 : index
    %c0_49 = arith.constant 0 : index
    %c0_50 = arith.constant 0 : index
    %84 = vector.load %arg9[%c0_47, %c1_48, %c0_49, %c0_50] : memref<1x8x16x128xbf16, #tpu.memory_space<vmem>>, vector<1x1x16x128xbf16>
    %85 = vector.shape_cast %84 : vector<1x1x16x128xbf16> to vector<16x128xbf16>
    %86 = arith.extf %85 : vector<16x128xbf16> to vector<16x128xf32>
    %87 = arith.maximumf %83, %86 : vector<16x128xf32>
    %c0_51 = arith.constant 0 : index
    %c2_52 = arith.constant 2 : index
    %c0_53 = arith.constant 0 : index
    %c0_54 = arith.constant 0 : index
    %88 = vector.load %arg9[%c0_51, %c2_52, %c0_53, %c0_54] : memref<1x8x16x128xbf16, #tpu.memory_space<vmem>>, vector<1x1x16x128xbf16>
    %89 = vector.shape_cast %88 : vector<1x1x16x128xbf16> to vector<16x128xbf16>
    %90 = arith.extf %89 : vector<16x128xbf16> to vector<16x128xf32>
    %c0_55 = arith.constant 0 : index
    %c3 = arith.constant 3 : index
    %c0_56 = arith.constant 0 : index
    %c0_57 = arith.constant 0 : index
    %91 = vector.load %arg9[%c0_55, %c3, %c0_56, %c0_57] : memref<1x8x16x128xbf16, #tpu.memory_space<vmem>>, vector<1x1x16x128xbf16>
    %92 = vector.shape_cast %91 : vector<1x1x16x128xbf16> to vector<16x128xbf16>
    %93 = arith.extf %92 : vector<16x128xbf16> to vector<16x128xf32>
    %94 = arith.maximumf %90, %93 : vector<16x128xf32>
    %95 = arith.maximumf %87, %94 : vector<16x128xf32>
    %c0_58 = arith.constant 0 : index
    %c4 = arith.constant 4 : index
    %c0_59 = arith.constant 0 : index
    %c0_60 = arith.constant 0 : index
    %96 = vector.load %arg9[%c0_58, %c4, %c0_59, %c0_60] : memref<1x8x16x128xbf16, #tpu.memory_space<vmem>>, vector<1x1x16x128xbf16>
    %97 = vector.shape_cast %96 : vector<1x1x16x128xbf16> to vector<16x128xbf16>
    %98 = arith.extf %97 : vector<16x128xbf16> to vector<16x128xf32>
    %c0_61 = arith.constant 0 : index
    %c5 = arith.constant 5 : index
    %c0_62 = arith.constant 0 : index
    %c0_63 = arith.constant 0 : index
    %99 = vector.load %arg9[%c0_61, %c5, %c0_62, %c0_63] : memref<1x8x16x128xbf16, #tpu.memory_space<vmem>>, vector<1x1x16x128xbf16>
    %100 = vector.shape_cast %99 : vector<1x1x16x128xbf16> to vector<16x128xbf16>
    %101 = arith.extf %100 : vector<16x128xbf16> to vector<16x128xf32>
    %102 = arith.maximumf %98, %101 : vector<16x128xf32>
    %103 = arith.maximumf %95, %102 : vector<16x128xf32>
    %c0_64 = arith.constant 0 : index
    %c6 = arith.constant 6 : index
    %c0_65 = arith.constant 0 : index
    %c0_66 = arith.constant 0 : index
    %104 = vector.load %arg9[%c0_64, %c6, %c0_65, %c0_66] : memref<1x8x16x128xbf16, #tpu.memory_space<vmem>>, vector<1x1x16x128xbf16>
    %105 = vector.shape_cast %104 : vector<1x1x16x128xbf16> to vector<16x128xbf16>
    %106 = arith.extf %105 : vector<16x128xbf16> to vector<16x128xf32>
    %c0_67 = arith.constant 0 : index
    %c7 = arith.constant 7 : index
    %c0_68 = arith.constant 0 : index
    %c0_69 = arith.constant 0 : index
    %107 = vector.load %arg9[%c0_67, %c7, %c0_68, %c0_69] : memref<1x8x16x128xbf16, #tpu.memory_space<vmem>>, vector<1x1x16x128xbf16>
    %108 = vector.shape_cast %107 : vector<1x1x16x128xbf16> to vector<16x128xbf16>
    %109 = arith.extf %108 : vector<16x128xbf16> to vector<16x128xf32>
    %110 = arith.maximumf %106, %109 : vector<16x128xf32>
    %111 = arith.maximumf %103, %110 : vector<16x128xf32>
    %cst_70 = arith.constant 0.000000e+00 : f32
    %112 = vector.broadcast %cst_70 : f32 to vector<16x128xf32>
    %cst_71 = arith.constant 0.000000e+00 : f32
    %113 = vector.broadcast %cst_71 : f32 to vector<16x128xf32>
    %c0_72 = arith.constant 0 : index
    %c0_73 = arith.constant 0 : index
    %c0_74 = arith.constant 0 : index
    %c0_75 = arith.constant 0 : index
    %114 = vector.load %arg9[%c0_72, %c0_73, %c0_74, %c0_75] : memref<1x8x16x128xbf16, #tpu.memory_space<vmem>>, vector<1x1x16x128xbf16>
    %115 = vector.shape_cast %114 : vector<1x1x16x128xbf16> to vector<16x128xbf16>
    %116 = arith.extf %115 : vector<16x128xbf16> to vector<16x128xf32>
    %117 = arith.subf %116, %111 : vector<16x128xf32>
    %118 = math.exp %117 : vector<16x128xf32>
    %119 = arith.addf %112, %118 : vector<16x128xf32>
    %c0_i32_76 = arith.constant 0 : i32
    %120 = vector.broadcast %c0_i32_76 : i32 to vector<16x128xi32>
    %121 = arith.cmpi eq, %76, %120 : vector<16x128xi32>
    %cst_77 = arith.constant 0.000000e+00 : f32
    %122 = vector.broadcast %cst_77 : f32 to vector<16x128xf32>
    %123 = arith.select %121, %116, %122 : vector<16x128xi1>, vector<16x128xf32>
    %124 = arith.addf %113, %123 : vector<16x128xf32>
    %c0_78 = arith.constant 0 : index
    %c1_79 = arith.constant 1 : index
    %c0_80 = arith.constant 0 : index
    %c0_81 = arith.constant 0 : index
    %125 = vector.load %arg9[%c0_78, %c1_79, %c0_80, %c0_81] : memref<1x8x16x128xbf16, #tpu.memory_space<vmem>>, vector<1x1x16x128xbf16>
    %126 = vector.shape_cast %125 : vector<1x1x16x128xbf16> to vector<16x128xbf16>
    %127 = arith.extf %126 : vector<16x128xbf16> to vector<16x128xf32>
    %128 = arith.subf %127, %111 : vector<16x128xf32>
    %129 = math.exp %128 : vector<16x128xf32>
    %130 = arith.addf %119, %129 : vector<16x128xf32>
    %c1_i32 = arith.constant 1 : i32
    %131 = vector.broadcast %c1_i32 : i32 to vector<16x128xi32>
    %132 = arith.cmpi eq, %76, %131 : vector<16x128xi32>
    %cst_82 = arith.constant 0.000000e+00 : f32
    %133 = vector.broadcast %cst_82 : f32 to vector<16x128xf32>
    %134 = arith.select %132, %127, %133 : vector<16x128xi1>, vector<16x128xf32>
    %135 = arith.addf %124, %134 : vector<16x128xf32>
    %c0_83 = arith.constant 0 : index
    %c2_84 = arith.constant 2 : index
    %c0_85 = arith.constant 0 : index
    %c0_86 = arith.constant 0 : index
    %136 = vector.load %arg9[%c0_83, %c2_84, %c0_85, %c0_86] : memref<1x8x16x128xbf16, #tpu.memory_space<vmem>>, vector<1x1x16x128xbf16>
    %137 = vector.shape_cast %136 : vector<1x1x16x128xbf16> to vector<16x128xbf16>
    %138 = arith.extf %137 : vector<16x128xbf16> to vector<16x128xf32>
    %139 = arith.subf %138, %111 : vector<16x128xf32>
    %140 = math.exp %139 : vector<16x128xf32>
    %141 = arith.addf %130, %140 : vector<16x128xf32>
    %c2_i32 = arith.constant 2 : i32
    %142 = vector.broadcast %c2_i32 : i32 to vector<16x128xi32>
    %143 = arith.cmpi eq, %76, %142 : vector<16x128xi32>
    %cst_87 = arith.constant 0.000000e+00 : f32
    %144 = vector.broadcast %cst_87 : f32 to vector<16x128xf32>
    %145 = arith.select %143, %138, %144 : vector<16x128xi1>, vector<16x128xf32>
    %146 = arith.addf %135, %145 : vector<16x128xf32>
    %c0_88 = arith.constant 0 : index
    %c3_89 = arith.constant 3 : index
    %c0_90 = arith.constant 0 : index
    %c0_91 = arith.constant 0 : index
    %147 = vector.load %arg9[%c0_88, %c3_89, %c0_90, %c0_91] : memref<1x8x16x128xbf16, #tpu.memory_space<vmem>>, vector<1x1x16x128xbf16>
    %148 = vector.shape_cast %147 : vector<1x1x16x128xbf16> to vector<16x128xbf16>
    %149 = arith.extf %148 : vector<16x128xbf16> to vector<16x128xf32>
    %150 = arith.subf %149, %111 : vector<16x128xf32>
    %151 = math.exp %150 : vector<16x128xf32>
    %152 = arith.addf %141, %151 : vector<16x128xf32>
    %c3_i32 = arith.constant 3 : i32
    %153 = vector.broadcast %c3_i32 : i32 to vector<16x128xi32>
    %154 = arith.cmpi eq, %76, %153 : vector<16x128xi32>
    %cst_92 = arith.constant 0.000000e+00 : f32
    %155 = vector.broadcast %cst_92 : f32 to vector<16x128xf32>
    %156 = arith.select %154, %149, %155 : vector<16x128xi1>, vector<16x128xf32>
    %157 = arith.addf %146, %156 : vector<16x128xf32>
    %c0_93 = arith.constant 0 : index
    %c4_94 = arith.constant 4 : index
    %c0_95 = arith.constant 0 : index
    %c0_96 = arith.constant 0 : index
    %158 = vector.load %arg9[%c0_93, %c4_94, %c0_95, %c0_96] : memref<1x8x16x128xbf16, #tpu.memory_space<vmem>>, vector<1x1x16x128xbf16>
    %159 = vector.shape_cast %158 : vector<1x1x16x128xbf16> to vector<16x128xbf16>
    %160 = arith.extf %159 : vector<16x128xbf16> to vector<16x128xf32>
    %161 = arith.subf %160, %111 : vector<16x128xf32>
    %162 = math.exp %161 : vector<16x128xf32>
    %163 = arith.addf %152, %162 : vector<16x128xf32>
    %c4_i32 = arith.constant 4 : i32
    %164 = vector.broadcast %c4_i32 : i32 to vector<16x128xi32>
    %165 = arith.cmpi eq, %76, %164 : vector<16x128xi32>
    %cst_97 = arith.constant 0.000000e+00 : f32
    %166 = vector.broadcast %cst_97 : f32 to vector<16x128xf32>
    %167 = arith.select %165, %160, %166 : vector<16x128xi1>, vector<16x128xf32>
    %168 = arith.addf %157, %167 : vector<16x128xf32>
    %c0_98 = arith.constant 0 : index
    %c5_99 = arith.constant 5 : index
    %c0_100 = arith.constant 0 : index
    %c0_101 = arith.constant 0 : index
    %169 = vector.load %arg9[%c0_98, %c5_99, %c0_100, %c0_101] : memref<1x8x16x128xbf16, #tpu.memory_space<vmem>>, vector<1x1x16x128xbf16>
    %170 = vector.shape_cast %169 : vector<1x1x16x128xbf16> to vector<16x128xbf16>
    %171 = arith.extf %170 : vector<16x128xbf16> to vector<16x128xf32>
    %172 = arith.subf %171, %111 : vector<16x128xf32>
    %173 = math.exp %172 : vector<16x128xf32>
    %174 = arith.addf %163, %173 : vector<16x128xf32>
    %c5_i32 = arith.constant 5 : i32
    %175 = vector.broadcast %c5_i32 : i32 to vector<16x128xi32>
    %176 = arith.cmpi eq, %76, %175 : vector<16x128xi32>
    %cst_102 = arith.constant 0.000000e+00 : f32
    %177 = vector.broadcast %cst_102 : f32 to vector<16x128xf32>
    %178 = arith.select %176, %171, %177 : vector<16x128xi1>, vector<16x128xf32>
    %179 = arith.addf %168, %178 : vector<16x128xf32>
    %c0_103 = arith.constant 0 : index
    %c6_104 = arith.constant 6 : index
    %c0_105 = arith.constant 0 : index
    %c0_106 = arith.constant 0 : index
    %180 = vector.load %arg9[%c0_103, %c6_104, %c0_105, %c0_106] : memref<1x8x16x128xbf16, #tpu.memory_space<vmem>>, vector<1x1x16x128xbf16>
    %181 = vector.shape_cast %180 : vector<1x1x16x128xbf16> to vector<16x128xbf16>
    %182 = arith.extf %181 : vector<16x128xbf16> to vector<16x128xf32>
    %183 = arith.subf %182, %111 : vector<16x128xf32>
    %184 = math.exp %183 : vector<16x128xf32>
    %185 = arith.addf %174, %184 : vector<16x128xf32>
    %c6_i32 = arith.constant 6 : i32
    %186 = vector.broadcast %c6_i32 : i32 to vector<16x128xi32>
    %187 = arith.cmpi eq, %76, %186 : vector<16x128xi32>
    %cst_107 = arith.constant 0.000000e+00 : f32
    %188 = vector.broadcast %cst_107 : f32 to vector<16x128xf32>
    %189 = arith.select %187, %182, %188 : vector<16x128xi1>, vector<16x128xf32>
    %190 = arith.addf %179, %189 : vector<16x128xf32>
    %c0_108 = arith.constant 0 : index
    %c7_109 = arith.constant 7 : index
    %c0_110 = arith.constant 0 : index
    %c0_111 = arith.constant 0 : index
    %191 = vector.load %arg9[%c0_108, %c7_109, %c0_110, %c0_111] : memref<1x8x16x128xbf16, #tpu.memory_space<vmem>>, vector<1x1x16x128xbf16>
    %192 = vector.shape_cast %191 : vector<1x1x16x128xbf16> to vector<16x128xbf16>
    %193 = arith.extf %192 : vector<16x128xbf16> to vector<16x128xf32>
    %194 = arith.subf %193, %111 : vector<16x128xf32>
    %195 = math.exp %194 : vector<16x128xf32>
    %196 = arith.addf %185, %195 : vector<16x128xf32>
    %c7_i32 = arith.constant 7 : i32
    %197 = vector.broadcast %c7_i32 : i32 to vector<16x128xi32>
    %198 = arith.cmpi eq, %76, %197 : vector<16x128xi32>
    %cst_112 = arith.constant 0.000000e+00 : f32
    %199 = vector.broadcast %cst_112 : f32 to vector<16x128xf32>
    %200 = arith.select %198, %193, %199 : vector<16x128xi1>, vector<16x128xf32>
    %201 = arith.addf %190, %200 : vector<16x128xf32>
    %202 = math.log %196 : vector<16x128xf32>
    %203 = arith.addf %202, %111 : vector<16x128xf32>
    %204 = arith.subf %203, %201 : vector<16x128xf32>
    %205 = arith.mulf %204, %80 : vector<16x128xf32>
    %cst_113 = arith.constant dense<0.000000e+00> : vector<128xf32>
    %206 = vector.multi_reduction <add>, %23, %cst_113 [0] : vector<16x128xf32> to vector<128xf32>
    %207 = vector.shape_cast %206 : vector<128xf32> to vector<1x128xf32>
    %cst_114 = arith.constant dense<0.000000e+00> : vector<128xf32>
    %208 = vector.multi_reduction <add>, %11, %cst_114 [0] : vector<16x128xf32> to vector<128xf32>
    %209 = vector.shape_cast %208 : vector<128xf32> to vector<1x128xf32>
    %cst_115 = arith.constant dense<0.000000e+00> : vector<128xf32>
    %210 = vector.multi_reduction <add>, %74, %cst_115 [0] : vector<16x128xf32> to vector<128xf32>
    %211 = vector.shape_cast %210 : vector<128xf32> to vector<1x128xf32>
    %cst_116 = arith.constant dense<0.000000e+00> : vector<128xf32>
    %212 = vector.multi_reduction <add>, %44, %cst_116 [0] : vector<16x128xf32> to vector<128xf32>
    %213 = vector.shape_cast %212 : vector<128xf32> to vector<1x128xf32>
    %cst_117 = arith.constant dense<0.000000e+00> : vector<128xf32>
    %214 = vector.multi_reduction <add>, %205, %cst_117 [0] : vector<16x128xf32> to vector<128xf32>
    %215 = vector.shape_cast %214 : vector<128xf32> to vector<1x128xf32>
    %cst_118 = arith.constant dense<0.000000e+00> : vector<128xf32>
    %216 = vector.multi_reduction <add>, %80, %cst_118 [0] : vector<16x128xf32> to vector<128xf32>
    %217 = vector.shape_cast %216 : vector<128xf32> to vector<1x128xf32>
    %cst_119 = arith.constant 0.000000e+00 : f32
    %218 = vector.broadcast %cst_119 : f32 to vector<2x128xf32>
    %219 = tpu.concatenate %207, %209, %211, %213, %215, %217, %218 in 0 : vector<1x128xf32>, vector<1x128xf32>, vector<1x128xf32>, vector<1x128xf32>, vector<1x128xf32>, vector<1x128xf32>, vector<2x128xf32> -> vector<8x128xf32>
    %c0_i32_120 = arith.constant 0 : i32
    %220 = arith.cmpi eq, %arg2, %c0_i32_120 : i32
    %221 = arith.extui %220 : i1 to i32
    %c0_i32_121 = arith.constant 0 : i32
    %222 = arith.cmpi ne, %221, %c0_i32_121 : i32
    scf.if %222 {
      %cst_130 = arith.constant 0.000000e+00 : f32
      %229 = vector.broadcast %cst_130 : f32 to vector<8x128xf32>
      %c0_131 = arith.constant 0 : index
      %c0_132 = arith.constant 0 : index
      %c0_133 = arith.constant 0 : index
      %c0_134 = arith.constant 0 : index
      %230 = vector.load %arg11[%c0_131, %c0_132, %c0_133, %c0_134] : memref<1x1x8x128xf32, #tpu.memory_space<vmem>>, vector<1x1x8x128xf32>
      %231 = vector.shape_cast %230 : vector<1x1x8x128xf32> to vector<8x128xf32>
      %232 = vector.shape_cast %229 : vector<8x128xf32> to vector<1x1x8x128xf32>
      tpu.vector_store %arg11[%c0_131, %c0_132, %c0_133, %c0_134], %232 {strides = array<i32>} : memref<1x1x8x128xf32, #tpu.memory_space<vmem>>, vector<1x1x8x128xf32>,
    } else {
    }
    %c0_122 = arith.constant 0 : index
    %c0_123 = arith.constant 0 : index
    %c0_124 = arith.constant 0 : index
    %c0_125 = arith.constant 0 : index
    %223 = vector.load %arg11[%c0_122, %c0_123, %c0_124, %c0_125] : memref<1x1x8x128xf32, #tpu.memory_space<vmem>>, vector<1x1x8x128xf32>
    %224 = vector.shape_cast %223 : vector<1x1x8x128xf32> to vector<8x128xf32>
    %225 = arith.addf %224, %219 : vector<8x128xf32>
    %c0_126 = arith.constant 0 : index
    %c0_127 = arith.constant 0 : index
    %c0_128 = arith.constant 0 : index
    %c0_129 = arith.constant 0 : index
    %226 = vector.load %arg11[%c0_126, %c0_127, %c0_128, %c0_129] : memref<1x1x8x128xf32, #tpu.memory_space<vmem>>, vector<1x1x8x128xf32>
    %227 = vector.shape_cast %226 : vector<1x1x8x128xf32> to vector<8x128xf32>
    %228 = vector.shape_cast %225 : vector<8x128xf32> to vector<1x1x8x128xf32>
    tpu.vector_store %arg11[%c0_126, %c0_127, %c0_128, %c0_129], %228 {strides = array<i32>} : memref<1x1x8x128xf32, #tpu.memory_space<vmem>>, vector<1x1x8x128xf32>,
    return
  }
  func.func @transform_0(%arg0: i32, %arg1: i32, %arg2: i32) -> i32 {
    %c0_i32 = arith.constant 0 : i32
    %c0_i32_0 = arith.constant 0 : i32
    return %c0_i32 : i32
  }
  func.func @transform_1(%arg0: i32, %arg1: i32, %arg2: i32) -> (i32, i32, i32, i32) {
    %c1_i32 = arith.constant 1 : i32
    %0 = arith.muli %arg1, %c1_i32 : i32
    %1 = arith.addi %0, %arg2 : i32
    %c0_i32 = arith.constant 0 : i32
    %c0_i32_0 = arith.constant 0 : i32
    %c0_i32_1 = arith.constant 0 : i32
    return %arg0, %c0_i32, %1, %c0_i32_0 : i32, i32, i32, i32
  }
  func.func @transform_2(%arg0: i32, %arg1: i32, %arg2: i32) -> (i32, i32, i32, i32) {
    %c1_i32 = arith.constant 1 : i32
    %0 = arith.muli %arg1, %c1_i32 : i32
    %1 = arith.addi %0, %arg2 : i32
    %c0_i32 = arith.constant 0 : i32
    %c0_i32_0 = arith.constant 0 : i32
    %c0_i32_1 = arith.constant 0 : i32
    return %arg0, %c0_i32, %1, %c0_i32_0 : i32, i32, i32, i32
  }
  func.func @transform_3(%arg0: i32, %arg1: i32, %arg2: i32) -> (i32, i32, i32, i32) {
    %c1_i32 = arith.constant 1 : i32
    %0 = arith.muli %arg1, %c1_i32 : i32
    %1 = arith.addi %0, %arg2 : i32
    %c0_i32 = arith.constant 0 : i32
    %c0_i32_0 = arith.constant 0 : i32
    %c0_i32_1 = arith.constant 0 : i32
    return %arg0, %c0_i32, %1, %c0_i32_0 : i32, i32, i32, i32
  }
  func.func @transform_4(%arg0: i32, %arg1: i32, %arg2: i32) -> (i32, i32, i32, i32) {
    %c1_i32 = arith.constant 1 : i32
    %0 = arith.muli %arg1, %c1_i32 : i32
    %1 = arith.addi %0, %arg2 : i32
    %c0_i32 = arith.constant 0 : i32
    %c0_i32_0 = arith.constant 0 : i32
    %c0_i32_1 = arith.constant 0 : i32
    return %arg0, %c0_i32, %1, %c0_i32_0 : i32, i32, i32, i32
  }
  func.func @transform_5(%arg0: i32, %arg1: i32, %arg2: i32) -> (i32, i32, i32, i32) {
    %c1_i32 = arith.constant 1 : i32
    %0 = arith.muli %arg1, %c1_i32 : i32
    %1 = arith.addi %0, %arg2 : i32
    %c0_i32 = arith.constant 0 : i32
    %c0_i32_0 = arith.constant 0 : i32
    %c0_i32_1 = arith.constant 0 : i32
    return %arg0, %c0_i32, %1, %c0_i32_0 : i32, i32, i32, i32
  }
  func.func @transform_6(%arg0: i32, %arg1: i32, %arg2: i32) -> (i32, i32, i32, i32) {
    %c1_i32 = arith.constant 1 : i32
    %0 = arith.muli %arg1, %c1_i32 : i32
    %1 = arith.addi %0, %arg2 : i32
    %c0_i32 = arith.constant 0 : i32
    %c0_i32_0 = arith.constant 0 : i32
    %c0_i32_1 = arith.constant 0 : i32
    return %arg0, %c0_i32, %1, %c0_i32_0 : i32, i32, i32, i32
  }
  func.func @transform_7(%arg0: i32, %arg1: i32, %arg2: i32) -> (i32, i32, i32) {
    %c1_i32 = arith.constant 1 : i32
    %0 = arith.muli %arg1, %c1_i32 : i32
    %1 = arith.addi %0, %arg2 : i32
    %c0_i32 = arith.constant 0 : i32
    %c0_i32_0 = arith.constant 0 : i32
    return %arg0, %1, %c0_i32 : i32, i32, i32
  }
  func.func @transform_8(%arg0: i32, %arg1: i32, %arg2: i32) -> (i32, i32, i32, i32) {
    %c0_i32 = arith.constant 0 : i32
    %c0_i32_0 = arith.constant 0 : i32
    %c0_i32_1 = arith.constant 0 : i32
    return %arg0, %arg1, %c0_i32, %c0_i32_0 : i32, i32, i32, i32
  }
}

</mosaic_0001>

<llo_original>
// kernel: tpu_custom_call.1
$region0: #{tpu_custom_call.1}
  #allocation0 [shape = 'u32[]', space=smem, size = 0x4, offset = 0x4, fixed_abs, tag = 'smem constant byte address 0x4 - core index']
  #allocation1 [shape = 'u32[72,128]{1,0:T(1,128)}', space=vmem, size = 0x9000, scoped, tag = 'internal scratch']
  #allocation17 [shape = 's32[]', space=sflag, size = 0x4, offset = 0, fixed_abs, tag = 'sflag constant byte address 0x0 - dummy sync flag']
  #allocation19 [shape = 's32[]', space=sflag, size = 0x4, offset = 0, fixed_abs, tag = 'sflag constant byte address 0x0 - dummy sync flag']
  #allocation21 [shape = 's32[]', space=sflag, size = 0x4, offset = 0, fixed_abs, tag = 'sflag constant byte address 0x0 - dummy sync flag']
  %s0 = inlined_call_operand.hbm [shape: f32[2], index: 0, kind: input, shape index: {}]
  %s1 = inlined_call_operand.hbm [shape: bf16[2,1,32,128], index: 1, kind: input, shape index: {}]
  %s2 = inlined_call_operand.hbm [shape: bf16[2,1,32,128], index: 2, kind: input, shape index: {}]
  %s3 = inlined_call_operand.hbm [shape: bf16[2,3,32,128], index: 3, kind: input, shape index: {}]
  %s4 = inlined_call_operand.hbm [shape: bf16[2,3,32,128], index: 4, kind: input, shape index: {}]
  %s5 = inlined_call_operand.hbm [shape: bf16[2,1,32,128], index: 5, kind: input, shape index: {}]
  %s6 = inlined_call_operand.hbm [shape: bf16[2,8,32,128], index: 6, kind: input, shape index: {}]
  %s7 = inlined_call_operand.hbm [shape: s32[2,32,128], index: 7, kind: input, shape index: {}]
  %s8 = inlined_call_operand.hbm [shape: f32[2,2,8,128], index: 8, kind: output, shape index: {}]
  %s9 = sld [smem:[#allocation0]]
  $region101: #{tpu_custom_call.1} parent=0
    _
  %s11 = ssub.s32 1, %s9
  %s12 = scalar_select 0, %s11, %s9
  $region1: #{tpu_custom_call.1} parent=0
    #allocation2 [shape = 'u8[512]{0}', space=smem, size = 0x200, scoped, tag = 'input window, operand 0, single buffered']
    #allocation3 [shape = 's32[2]{0}', space=sflag, size = 0x8, scoped, tag = 'scoped memory for tpu_custom_call.1']
    #allocation4 [shape = 's32[2]{0}', space=sflag, size = 0x8, scoped, tag = 'scoped memory for tpu_custom_call.1']
    #allocation5 [shape = 's32[2]{0}', space=sflag, size = 0x8, scoped, tag = 'scoped memory for tpu_custom_call.1']
    #allocation6 [shape = 'u8[8192]{0}', space=vmem, size = 0x2000, scoped, tag = 'input window, operand 1']
    #allocation7 [shape = 'u8[8192]{0}', space=vmem, size = 0x2000, scoped, tag = 'input window, operand 2']
    #allocation8 [shape = 's32[2]{0}', space=sflag, size = 0x8, scoped, tag = 'scoped memory for tpu_custom_call.1']
    #allocation9 [shape = 'u8[24576]{0}', space=vmem, size = 0x6000, scoped, tag = 'input window, operand 3']
    #allocation10 [shape = 'u8[24576]{0}', space=vmem, size = 0x6000, scoped, tag = 'input window, operand 4']
    #allocation11 [shape = 's32[2]{0}', space=sflag, size = 0x8, scoped, tag = 'scoped memory for tpu_custom_call.1']
    #allocation12 [shape = 'u8[8192]{0}', space=vmem, size = 0x2000, scoped, tag = 'input window, operand 5']
    #allocation13 [shape = 'u8[65536]{0}', space=vmem, size = 0x10000, scoped, tag = 'input window, operand 6']
    #allocation14 [shape = 's32[2]{0}', space=sflag, size = 0x8, scoped, tag = 'scoped memory for tpu_custom_call.1']
    #allocation15 [shape = 'u8[16384]{0}', space=vmem, size = 0x4000, scoped, tag = 'input window, operand 7']
    #allocation16 [shape = 'u8[8192]{0}', space=vmem, size = 0x2000, scoped, tag = 'output window, operand 0']
    %13 = vsyncpa [#allocation5], 0
    %14 = vsyncpa [#allocation3], 0
    %s15 = scalar_lea.sflag [#allocation3], 1
    %16 = vsyncpa %s15, 0
    %17 = vsyncpa [#allocation8], 0
    %s18 = scalar_lea.sflag [#allocation8], 1
    %19 = vsyncpa %s18, 0
    %20 = vsyncpa [#allocation11], 0
    %s21 = scalar_lea.sflag [#allocation11], 1
    %22 = vsyncpa %s21, 0
    %23 = vsyncpa [#allocation14], 0
    %s24 = scalar_lea.sflag [#allocation14], 1
    %25 = vsyncpa %s24, 0
    %26 = vsyncpa [#allocation4], 0
    %s27 = scalar_lea.sflag [#allocation4], 1
    %28 = vsyncpa %s27, 0
    loop: start=0, step=1, limit=6
    $region2: #{tpu_custom_call.1} parent=1 // loop_pre_header
      _
    $region3: #{tpu_custom_call.1} parent=1 // loop_header
      %s30 = sphi 0, %s34
      %p31 = scmp.ge.s32.totalorder %s30, 6
      %s37 = sphi 0, %s56
      %s38 = sphi 0, %s52
      %s39 = sphi 0, %s48
      %s40 = sphi 0, %s37
      %s41 = sphi 0, %s38
      %s42 = sphi 0, %s39
      %s43 = sphi 0, %s40
      %s44 = sphi 0, %s41
      %s45 = sphi 0, %s42
      %s57 = sphi 0, %s57
      %s59 = sphi 0, %s57
      %s60 = sphi 0, %s59
      %s74 = sphi 0, %s60
      %s84 = sphi 0, %s86
      %s87 = sphi 0, %s84
      %s88 = sphi 0, %s87
      %s104 = sphi 0, %s88
      %s114 = sphi 0, %s116
      %s117 = sphi 0, %s114
      %s118 = sphi 0, %s117
      %s134 = sphi 0, %s118
      %s144 = sphi 0, %s146
      %s147 = sphi 0, %s144
      %s148 = sphi 0, %s147
      %s164 = sphi 0, %s148
      %s174 = sphi 0, %s176
      %s177 = sphi 0, %s174
      %s178 = sphi 0, %s177
      %s194 = sphi 0, %s178
      %s204 = sphi 0, %s206
      %s207 = sphi 0, %s204
      %s208 = sphi 0, %s207
      %s224 = sphi 0, %s208
      %s234 = sphi 0, %s236
      %s237 = sphi 0, %s234
      %s238 = sphi 0, %s237
      %s254 = sphi 0, %s238
      %s264 = sphi 0, %s266
      %s267 = sphi 0, %s264
      %s268 = sphi 0, %s267
      %s284 = sphi 0, %s268
      %s292 = sphi 0, %s294
      %s295 = sphi 0, %s292
      %s296 = sphi 0, %s295
      %s312 = sphi 0, %s296
    $region4: #{tpu_custom_call.1} parent=1 // loop_header_branch
      %33 = sbr.rel (%p31) target = $region8
    $region5: #{tpu_custom_call.1} parent=1 // loop_body
      %s35 = ssub.s32 %s30, 1
      %s36 = ssub.s32 %s30, 2
      %s46 = sadd.s32 1, %s39
      %p47 = scmp.ge.s32.totalorder %s46, 1
      %s48 = scalar_select %p47, 0, %s46
      %s49 = sadd.s32 1, %s38
      %s50 = scalar_select %p47, %s49, %s38
      %p51 = scmp.ge.s32.totalorder %s50, 2
      %s52 = scalar_select %p51, 0, %s50
      %s53 = sadd.s32 1, %s37
      %s54 = scalar_select %p51, %s53, %s37
      %p55 = scmp.ge.s32.totalorder %s54, 2
      %s56 = scalar_select %p55, 0, %s54
      %s58 = sadd.s32 %s57, 1
      %p61 = scmp.eq.s32.totalorder %s30, 3
      %p62 = scmp.ne.s32.totalorder %s57, %s59
      %p63 = scmp.eq.s32.totalorder %s30, 0
      %p64 = por %p62, %p63
      %p65 = scmp.ne.s32.totalorder %s57, %s59
      %p66 = scmp.eq.s32.totalorder %s35, 3
      %p67 = por %p65, %p66
      %p68 = scmp.ne.s32.totalorder %s59, %s60
      %p69 = scmp.eq.s32.totalorder %s35, 0
      %p70 = por %p68, %p69
      %p71 = scmp.ne.s32.totalorder %s59, %s60
      %p72 = scmp.eq.s32.totalorder %s36, 3
      %p73 = por %p71, %p72
      %p75 = scmp.ne.s32.totalorder %s60, %s74
      %p76 = scmp.eq.s32.totalorder %s36, 0
      %p77 = por %p75, %p76
      %s78 = sadd.s32 %s38, %s39
      %s79 = sadd.s32 %s52, %s48
      %s80 = ssub.s32 %s37, %s56
      %s81 = ssub.s32 %s78, %s79
      %s82 = sor.u32 %s80, %s81
      %p83 = scmp.eq.s32.totalorder %s82, 0
      %s85 = sadd.s32 %s84, 1
      %s86 = scalar_select %p83, %s84, %s85
      %p89 = pneg %p83
      %p90 = scmp.eq.s32.totalorder %s30, 3
      %p91 = por %p89, %p90
      %p92 = scmp.ne.s32.totalorder %s84, %s87
      %p93 = scmp.eq.s32.totalorder %s30, 0
      %p94 = por %p92, %p93
      %p95 = scmp.ne.s32.totalorder %s84, %s87
      %p96 = scmp.eq.s32.totalorder %s35, 3
      %p97 = por %p95, %p96
      %p98 = scmp.ne.s32.totalorder %s87, %s88
      %p99 = scmp.eq.s32.totalorder %s35, 0
      %p100 = por %p98, %p99
      %p101 = scmp.ne.s32.totalorder %s87, %s88
      %p102 = scmp.eq.s32.totalorder %s36, 3
      %p103 = por %p101, %p102
      %p105 = scmp.ne.s32.totalorder %s88, %s104
      %p106 = scmp.eq.s32.totalorder %s36, 0
      %p107 = por %p105, %p106
      %s108 = sadd.s32 %s38, %s39
      %s109 = sadd.s32 %s52, %s48
      %s110 = ssub.s32 %s37, %s56
      %s111 = ssub.s32 %s108, %s109
      %s112 = sor.u32 %s110, %s111
      %p113 = scmp.eq.s32.totalorder %s112, 0
      %s115 = sadd.s32 %s114, 1
      %s116 = scalar_select %p113, %s114, %s115
      %p119 = pneg %p113
      %p120 = scmp.eq.s32.totalorder %s30, 3
      %p121 = por %p119, %p120
      %p122 = scmp.ne.s32.totalorder %s114, %s117
      %p123 = scmp.eq.s32.totalorder %s30, 0
      %p124 = por %p122, %p123
      %p125 = scmp.ne.s32.totalorder %s114, %s117
      %p126 = scmp.eq.s32.totalorder %s35, 3
      %p127 = por %p125, %p126
      %p128 = scmp.ne.s32.totalorder %s117, %s118
      %p129 = scmp.eq.s32.totalorder %s35, 0
      %p130 = por %p128, %p129
      %p131 = scmp.ne.s32.totalorder %s117, %s118
      %p132 = scmp.eq.s32.totalorder %s36, 3
      %p133 = por %p131, %p132
      %p135 = scmp.ne.s32.totalorder %s118, %s134
      %p136 = scmp.eq.s32.totalorder %s36, 0
      %p137 = por %p135, %p136
      %s138 = sadd.s32 %s38, %s39
      %s139 = sadd.s32 %s52, %s48
      %s140 = ssub.s32 %s37, %s56
      %s141 = ssub.s32 %s138, %s139
      %s142 = sor.u32 %s140, %s141
      %p143 = scmp.eq.s32.totalorder %s142, 0
      %s145 = sadd.s32 %s144, 1
      %s146 = scalar_select %p143, %s144, %s145
      %p149 = pneg %p143
      %p150 = scmp.eq.s32.totalorder %s30, 3
      %p151 = por %p149, %p150
      %p152 = scmp.ne.s32.totalorder %s144, %s147
      %p153 = scmp.eq.s32.totalorder %s30, 0
      %p154 = por %p152, %p153
      %p155 = scmp.ne.s32.totalorder %s144, %s147
      %p156 = scmp.eq.s32.totalorder %s35, 3
      %p157 = por %p155, %p156
      %p158 = scmp.ne.s32.totalorder %s147, %s148
      %p159 = scmp.eq.s32.totalorder %s35, 0
      %p160 = por %p158, %p159
      %p161 = scmp.ne.s32.totalorder %s147, %s148
      %p162 = scmp.eq.s32.totalorder %s36, 3
      %p163 = por %p161, %p162
      %p165 = scmp.ne.s32.totalorder %s148, %s164
      %p166 = scmp.eq.s32.totalorder %s36, 0
      %p167 = por %p165, %p166
      %s168 = sadd.s32 %s38, %s39
      %s169 = sadd.s32 %s52, %s48
      %s170 = ssub.s32 %s37, %s56
      %s171 = ssub.s32 %s168, %s169
      %s172 = sor.u32 %s170, %s171
      %p173 = scmp.eq.s32.totalorder %s172, 0
      %s175 = sadd.s32 %s174, 1
      %s176 = scalar_select %p173, %s174, %s175
      %p179 = pneg %p173
      %p180 = scmp.eq.s32.totalorder %s30, 3
      %p181 = por %p179, %p180
      %p182 = scmp.ne.s32.totalorder %s174, %s177
      %p183 = scmp.eq.s32.totalorder %s30, 0
      %p184 = por %p182, %p183
      %p185 = scmp.ne.s32.totalorder %s174, %s177
      %p186 = scmp.eq.s32.totalorder %s35, 3
      %p187 = por %p185, %p186
      %p188 = scmp.ne.s32.totalorder %s177, %s178
      %p189 = scmp.eq.s32.totalorder %s35, 0
      %p190 = por %p188, %p189
      %p191 = scmp.ne.s32.totalorder %s177, %s178
      %p192 = scmp.eq.s32.totalorder %s36, 3
      %p193 = por %p191, %p192
      %p195 = scmp.ne.s32.totalorder %s178, %s194
      %p196 = scmp.eq.s32.totalorder %s36, 0
      %p197 = por %p195, %p196
      %s198 = sadd.s32 %s38, %s39
      %s199 = sadd.s32 %s52, %s48
      %s200 = ssub.s32 %s37, %s56
      %s201 = ssub.s32 %s198, %s199
      %s202 = sor.u32 %s200, %s201
      %p203 = scmp.eq.s32.totalorder %s202, 0
      %s205 = sadd.s32 %s204, 1
      %s206 = scalar_select %p203, %s204, %s205
      %p209 = pneg %p203
      %p210 = scmp.eq.s32.totalorder %s30, 3
      %p211 = por %p209, %p210
      %p212 = scmp.ne.s32.totalorder %s204, %s207
      %p213 = scmp.eq.s32.totalorder %s30, 0
      %p214 = por %p212, %p213
      %p215 = scmp.ne.s32.totalorder %s204, %s207
      %p216 = scmp.eq.s32.totalorder %s35, 3
      %p217 = por %p215, %p216
      %p218 = scmp.ne.s32.totalorder %s207, %s208
      %p219 = scmp.eq.s32.totalorder %s35, 0
      %p220 = por %p218, %p219
      %p221 = scmp.ne.s32.totalorder %s207, %s208
      %p222 = scmp.eq.s32.totalorder %s36, 3
      %p223 = por %p221, %p222
      %p225 = scmp.ne.s32.totalorder %s208, %s224
      %p226 = scmp.eq.s32.totalorder %s36, 0
      %p227 = por %p225, %p226
      %s228 = sadd.s32 %s38, %s39
      %s229 = sadd.s32 %s52, %s48
      %s230 = ssub.s32 %s37, %s56
      %s231 = ssub.s32 %s228, %s229
      %s232 = sor.u32 %s230, %s231
      %p233 = scmp.eq.s32.totalorder %s232, 0
      %s235 = sadd.s32 %s234, 1
      %s236 = scalar_select %p233, %s234, %s235
      %p239 = pneg %p233
      %p240 = scmp.eq.s32.totalorder %s30, 3
      %p241 = por %p239, %p240
      %p242 = scmp.ne.s32.totalorder %s234, %s237
      %p243 = scmp.eq.s32.totalorder %s30, 0
      %p244 = por %p242, %p243
      %p245 = scmp.ne.s32.totalorder %s234, %s237
      %p246 = scmp.eq.s32.totalorder %s35, 3
      %p247 = por %p245, %p246
      %p248 = scmp.ne.s32.totalorder %s237, %s238
      %p249 = scmp.eq.s32.totalorder %s35, 0
      %p250 = por %p248, %p249
      %p251 = scmp.ne.s32.totalorder %s237, %s238
      %p252 = scmp.eq.s32.totalorder %s36, 3
      %p253 = por %p251, %p252
      %p255 = scmp.ne.s32.totalorder %s238, %s254
      %p256 = scmp.eq.s32.totalorder %s36, 0
      %p257 = por %p255, %p256
      %s258 = sadd.s32 %s38, %s39
      %s259 = sadd.s32 %s52, %s48
      %s260 = ssub.s32 %s37, %s56
      %s261 = ssub.s32 %s258, %s259
      %s262 = sor.u32 %s260, %s261
      %p263 = scmp.eq.s32.totalorder %s262, 0
      %s265 = sadd.s32 %s264, 1
      %s266 = scalar_select %p263, %s264, %s265
      %p269 = pneg %p263
      %p270 = scmp.eq.s32.totalorder %s30, 3
      %p271 = por %p269, %p270
      %p272 = scmp.ne.s32.totalorder %s264, %s267
      %p273 = scmp.eq.s32.totalorder %s30, 0
      %p274 = por %p272, %p273
      %p275 = scmp.ne.s32.totalorder %s264, %s267
      %p276 = scmp.eq.s32.totalorder %s35, 3
      %p277 = por %p275, %p276
      %p278 = scmp.ne.s32.totalorder %s267, %s268
      %p279 = scmp.eq.s32.totalorder %s35, 0
      %p280 = por %p278, %p279
      %p281 = scmp.ne.s32.totalorder %s267, %s268
      %p282 = scmp.eq.s32.totalorder %s36, 3
      %p283 = por %p281, %p282
      %p285 = scmp.ne.s32.totalorder %s268, %s284
      %p286 = scmp.eq.s32.totalorder %s36, 0
      %p287 = por %p285, %p286
      %s288 = ssub.s32 %s37, %s56
      %s289 = ssub.s32 %s38, %s52
      %s290 = sor.u32 %s288, %s289
      %p291 = scmp.eq.s32.totalorder %s290, 0
      %s293 = sadd.s32 %s292, 1
      %s294 = scalar_select %p291, %s292, %s293
      %p297 = pneg %p291
      %p298 = scmp.eq.s32.totalorder %s30, 3
      %p299 = por %p297, %p298
      %p300 = scmp.ne.s32.totalorder %s292, %s295
      %p301 = scmp.eq.s32.totalorder %s30, 0
      %p302 = por %p300, %p301
      %p303 = scmp.ne.s32.totalorder %s292, %s295
      %p304 = scmp.eq.s32.totalorder %s35, 3
      %p305 = por %p303, %p304
      %p306 = scmp.ne.s32.totalorder %s295, %s296
      %p307 = scmp.eq.s32.totalorder %s35, 0
      %p308 = por %p306, %p307
      %p309 = scmp.ne.s32.totalorder %s295, %s296
      %p310 = scmp.eq.s32.totalorder %s36, 3
      %p311 = por %p309, %p310
      %p313 = scmp.ne.s32.totalorder %s296, %s312
      %p314 = scmp.eq.s32.totalorder %s36, 0
      %p315 = por %p313, %p314
      %p316 = scmp.le.s32.totalorder 1, %s30
      %p317 = scmp.lt.s32.totalorder %s30, 5
      %p318 = pnand %p316, %p317
      %p319 = pneg %p318
      // Predicated region
      $region9: #{tpu_custom_call.1} parent=5 // pred_check
        _
      $region10: #{tpu_custom_call.1} parent=5 // pred_check_branch
        %321 = sbr.rel (%p318) target = $region12
      $region11: #{tpu_custom_call.1} parent=5 // pred_region
        %s322 = ssub.s32 %s30, 1
        // Predicated region
        $region13: #{tpu_custom_call.1} parent=11 // pred_check
          %p323 = pneg %p70
        $region14: #{tpu_custom_call.1} parent=11 // pred_check_branch
          %325 = sbr.rel (%p323) target = $region16
        $region15: #{tpu_custom_call.1} parent=11 // pred_region
          %327 = vsyncadd [#allocation5], 0
          %s329 = sshll.u32 %s0, 4
          %s330 = int_to_ptr.hbm [resolvable:$true] %s329
          %332 = dma.hbm_to_smem %s330, 16, [#allocation2], [#allocation5]
        $region16: #{tpu_custom_call.1} parent=11 // pred_fallthru
          _
      $region12: #{tpu_custom_call.1} parent=5 // pred_fallthru
        _
      %p333 = scmp.lt.s32.totalorder %s30, 4
      // Predicated region
      $region17: #{tpu_custom_call.1} parent=5 // pred_check
        %p334 = pneg %p333
      $region18: #{tpu_custom_call.1} parent=5 // pred_check_branch
        %336 = sbr.rel (%p334) target = $region20
      $region19: #{tpu_custom_call.1} parent=5 // pred_region
        // Predicated region
        $region21: #{tpu_custom_call.1} parent=19 // pred_check
          %p337 = pneg %p94
        $region22: #{tpu_custom_call.1} parent=19 // pred_check_branch
          %339 = sbr.rel (%p337) target = $region24
        $region23: #{tpu_custom_call.1} parent=19 // pred_region
          %s340 = sand.u32 %s84, 1
          %s341 = scalar_lea.sflag [#allocation3], %s340
          %s342 = sand.u32 %s84, 1
          %s343 = smul.addr %s342, 8
          %s344 = scalar_lea.vmem [#allocation6], %s343
          %s345 = sadd.s32 %s38, %s39
          %s346 = smul.u32 2, %s345
          %348 = vsyncadd %s341, 0
          %s349 = smul.addr %s37, 4
          %s350 = sadd.s32 %s346, %s349
          %s351 = smul.addr %s350, 4
          %s352 = scalar_lea.hbm %s1, %s351
          %s353 = sshll.u32 %s352, 4
          %s354 = int_to_ptr.hbm [resolvable:$true] %s353
          %s355 = sshll.u32 %s344, 4
          %s356 = int_to_ptr.vmem [resolvable:$true] %s355
          %361 = dma.hbm_to_vmem [thread:$0]  %s354, 128, %s356, %s341, 64, 64, 4
        $region24: #{tpu_custom_call.1} parent=19 // pred_fallthru
          _
        // Predicated region
        $region25: #{tpu_custom_call.1} parent=19 // pred_check
          %p362 = pneg %p124
        $region26: #{tpu_custom_call.1} parent=19 // pred_check_branch
          %364 = sbr.rel (%p362) target = $region28
        $region27: #{tpu_custom_call.1} parent=19 // pred_region
          %s365 = sand.u32 %s30, 1
          %s366 = scalar_lea.sflag [#allocation8], %s365
          %s367 = sand.u32 %s114, 1
          %s368 = smul.addr %s367, 8
          %s369 = scalar_lea.vmem [#allocation7], %s368
          %s370 = sadd.s32 %s38, %s39
          %s371 = smul.u32 2, %s370
          %373 = vsyncadd %s366, 0
          %s374 = smul.addr %s37, 4
          %s375 = sadd.s32 %s371, %s374
          %s376 = smul.addr %s375, 4
          %s377 = scalar_lea.hbm %s2, %s376
          %s378 = sshll.u32 %s377, 4
          %s379 = int_to_ptr.hbm [resolvable:$true] %s378
          %s380 = sshll.u32 %s369, 4
          %s381 = int_to_ptr.vmem [resolvable:$true] %s380
          %386 = dma.hbm_to_vmem [thread:$0]  %s379, 128, %s381, %s366, 64, 64, 4
        $region28: #{tpu_custom_call.1} parent=19 // pred_fallthru
          _
        // Predicated region
        $region29: #{tpu_custom_call.1} parent=19 // pred_check
          %p387 = pneg %p154
        $region30: #{tpu_custom_call.1} parent=19 // pred_check_branch
          %389 = sbr.rel (%p387) target = $region32
        $region31: #{tpu_custom_call.1} parent=19 // pred_region
          #allocation18 [shape = 'u32[6]{0}', space=smem, size = 0x18, scoped, tag = 'DMA stride descriptor']
          %s390 = sand.u32 %s30, 1
          %s391 = scalar_lea.sflag [#allocation8], %s390
          %s392 = sand.u32 %s144, 1
          %s393 = smul.addr %s392, 24
          %s394 = scalar_lea.vmem [#allocation9], %s393
          %s395 = sadd.s32 %s38, %s39
          %s396 = smul.u32 2, %s395
          %398 = vsyncadd %s391, 0
          %s399 = smul.addr %s37, 12
          %s400 = sadd.s32 %s396, %s399
          %s401 = smul.addr %s400, 4
          %s402 = scalar_lea.hbm %s3, %s401
          %s404 = sshll.u32 1, 14
          %s405 = sxor.u32 4294967295, %s404
          %s407 = sld [smem:[#allocation0]]
          %s408 = sadd.s32 2, %s407
          %s410 = sshll.u32 7, 26
          %s411 = sxor.u32 4294967295, %s410
          %s412 = sand.u32 0, %s411
          %s413 = sshll.u32 %s408, 26
          %s414 = sor.u32 %s412, %s413
          %s415 = sshll.u32 %s402, 4
          %s416 = int_to_ptr.hbm [resolvable:$true] %s415
          %s417 = sshll.u32 %s394, 4
          %s418 = int_to_ptr.vmem [resolvable:$true] %s417
          %424 = sst [smem:[#allocation18]] 256
          %s425 = scalar_lea.smem [#allocation18], 1
          %426 = sst [smem:[%s425]] 128
          %s427 = scalar_lea.smem [#allocation18], 2
          %428 = sst [smem:[%s427]] 2
          %s429 = scalar_lea.smem [#allocation18], 3
          %430 = sst [smem:[%s429]] 64
          %s431 = scalar_lea.smem [#allocation18], 4
          %432 = sst [smem:[%s431]] 64
          %s433 = scalar_lea.smem [#allocation18], 5
          %434 = sst [smem:[%s433]] 4
          %436 = dma.general %s416, 384, %s418, %s391, [#allocation17], [#allocation18], %s414, 0
        $region32: #{tpu_custom_call.1} parent=19 // pred_fallthru
          _
        // Predicated region
        $region33: #{tpu_custom_call.1} parent=19 // pred_check
          %p437 = pneg %p184
        $region34: #{tpu_custom_call.1} parent=19 // pred_check_branch
          %439 = sbr.rel (%p437) target = $region36
        $region35: #{tpu_custom_call.1} parent=19 // pred_region
          #allocation20 [shape = 'u32[6]{0}', space=smem, size = 0x18, scoped, tag = 'DMA stride descriptor']
          %s440 = sand.u32 %s30, 1
          %s441 = scalar_lea.sflag [#allocation11], %s440
          %s442 = sand.u32 %s174, 1
          %s443 = smul.addr %s442, 24
          %s444 = scalar_lea.vmem [#allocation10], %s443
          %s445 = sadd.s32 %s38, %s39
          %s446 = smul.u32 2, %s445
          %448 = vsyncadd %s441, 0
          %s449 = smul.addr %s37, 12
          %s450 = sadd.s32 %s446, %s449
          %s451 = smul.addr %s450, 4
          %s452 = scalar_lea.hbm %s4, %s451
          %s454 = sshll.u32 1, 14
          %s455 = sxor.u32 4294967295, %s454
          %s457 = sld [smem:[#allocation0]]
          %s458 = sadd.s32 2, %s457
          %s460 = sshll.u32 7, 26
          %s461 = sxor.u32 4294967295, %s460
          %s462 = sand.u32 0, %s461
          %s463 = sshll.u32 %s458, 26
          %s464 = sor.u32 %s462, %s463
          %s465 = sshll.u32 %s452, 4
          %s466 = int_to_ptr.hbm [resolvable:$true] %s465
          %s467 = sshll.u32 %s444, 4
          %s468 = int_to_ptr.vmem [resolvable:$true] %s467
          %474 = sst [smem:[#allocation20]] 256
          %s475 = scalar_lea.smem [#allocation20], 1
          %476 = sst [smem:[%s475]] 128
          %s477 = scalar_lea.smem [#allocation20], 2
          %478 = sst [smem:[%s477]] 2
          %s479 = scalar_lea.smem [#allocation20], 3
          %480 = sst [smem:[%s479]] 64
          %s481 = scalar_lea.smem [#allocation20], 4
          %482 = sst [smem:[%s481]] 64
          %s483 = scalar_lea.smem [#allocation20], 5
          %484 = sst [smem:[%s483]] 4
          %486 = dma.general %s466, 384, %s468, %s441, [#allocation19], [#allocation20], %s464, 0
        $region36: #{tpu_custom_call.1} parent=19 // pred_fallthru
          _
        // Predicated region
        $region37: #{tpu_custom_call.1} parent=19 // pred_check
          %p487 = pneg %p214
        $region38: #{tpu_custom_call.1} parent=19 // pred_check_branch
          %489 = sbr.rel (%p487) target = $region40
        $region39: #{tpu_custom_call.1} parent=19 // pred_region
          %s490 = sand.u32 %s30, 1
          %s491 = scalar_lea.sflag [#allocation11], %s490
          %s492 = sand.u32 %s204, 1
          %s493 = smul.addr %s492, 8
          %s494 = scalar_lea.vmem [#allocation12], %s493
          %s495 = sadd.s32 %s38, %s39
          %s496 = smul.u32 2, %s495
          %498 = vsyncadd %s491, 0
          %s499 = smul.addr %s37, 4
          %s500 = sadd.s32 %s496, %s499
          %s501 = smul.addr %s500, 4
          %s502 = scalar_lea.hbm %s5, %s501
          %s503 = sshll.u32 %s502, 4
          %s504 = int_to_ptr.hbm [resolvable:$true] %s503
          %s505 = sshll.u32 %s494, 4
          %s506 = int_to_ptr.vmem [resolvable:$true] %s505
          %511 = dma.hbm_to_vmem [thread:$0]  %s504, 128, %s506, %s491, 64, 64, 4
        $region40: #{tpu_custom_call.1} parent=19 // pred_fallthru
          _
        // Predicated region
        $region41: #{tpu_custom_call.1} parent=19 // pred_check
          %p512 = pneg %p244
        $region42: #{tpu_custom_call.1} parent=19 // pred_check_branch
          %514 = sbr.rel (%p512) target = $region44
        $region43: #{tpu_custom_call.1} parent=19 // pred_region
          #allocation22 [shape = 'u32[6]{0}', space=smem, size = 0x18, scoped, tag = 'DMA stride descriptor']
          %s515 = sand.u32 %s30, 1
          %s516 = scalar_lea.sflag [#allocation14], %s515
          %s517 = sand.u32 %s234, 1
          %s518 = smul.addr %s517, 64
          %s519 = scalar_lea.vmem [#allocation13], %s518
          %s520 = sadd.s32 %s38, %s39
          %s521 = smul.u32 2, %s520
          %523 = vsyncadd %s516, 0
          %s524 = smul.addr %s37, 32
          %s525 = sadd.s32 %s521, %s524
          %s526 = smul.addr %s525, 4
          %s527 = scalar_lea.hbm %s6, %s526
          %s529 = sshll.u32 1, 14
          %s530 = sxor.u32 4294967295, %s529
          %s532 = sld [smem:[#allocation0]]
          %s533 = sadd.s32 2, %s532
          %s535 = sshll.u32 7, 26
          %s536 = sxor.u32 4294967295, %s535
          %s537 = sand.u32 0, %s536
          %s538 = sshll.u32 %s533, 26
          %s539 = sor.u32 %s537, %s538
          %s540 = sshll.u32 %s527, 4
          %s541 = int_to_ptr.hbm [resolvable:$true] %s540
          %s542 = sshll.u32 %s519, 4
          %s543 = int_to_ptr.vmem [resolvable:$true] %s542
          %549 = sst [smem:[#allocation22]] 256
          %s550 = scalar_lea.smem [#allocation22], 1
          %551 = sst [smem:[%s550]] 128
          %s552 = scalar_lea.smem [#allocation22], 2
          %553 = sst [smem:[%s552]] 2
          %s554 = scalar_lea.smem [#allocation22], 3
          %555 = sst [smem:[%s554]] 64
          %s556 = scalar_lea.smem [#allocation22], 4
          %557 = sst [smem:[%s556]] 64
          %s558 = scalar_lea.smem [#allocation22], 5
          %559 = sst [smem:[%s558]] 4
          %561 = dma.general %s541, 1024, %s543, %s516, [#allocation21], [#allocation22], %s539, 0
        $region44: #{tpu_custom_call.1} parent=19 // pred_fallthru
          _
        // Predicated region
        $region45: #{tpu_custom_call.1} parent=19 // pred_check
          %p562 = pneg %p274
        $region46: #{tpu_custom_call.1} parent=19 // pred_check_branch
          %564 = sbr.rel (%p562) target = $region48
        $region47: #{tpu_custom_call.1} parent=19 // pred_region
          %s565 = sand.u32 %s30, 1
          %s566 = scalar_lea.sflag [#allocation14], %s565
          %s567 = sand.u32 %s264, 1
          %s568 = smul.addr %s567, 16
          %s569 = scalar_lea.vmem [#allocation15], %s568
          %s570 = sadd.s32 %s38, %s39
          %s571 = smul.u32 2, %s570
          %573 = vsyncadd %s566, 0
          %s574 = smul.addr %s37, 4
          %s575 = sadd.s32 %s571, %s574
          %s576 = smul.addr %s575, 8
          %s577 = scalar_lea.hbm %s7, %s576
          %s578 = sshll.u32 %s577, 4
          %s579 = int_to_ptr.hbm [resolvable:$true] %s578
          %s580 = sshll.u32 %s569, 4
          %s581 = int_to_ptr.vmem [resolvable:$true] %s580
          %586 = dma.hbm_to_vmem [thread:$0]  %s579, 256, %s581, %s566, 128, 128, 8
        $region48: #{tpu_custom_call.1} parent=19 // pred_fallthru
          _
      $region20: #{tpu_custom_call.1} parent=5 // pred_fallthru
        _
      %p587 = scmp.le.s32.totalorder 1, %s30
      %p588 = scmp.lt.s32.totalorder %s30, 5
      %p589 = pnand %p587, %p588
      %p590 = pneg %p589
      // Predicated region
      $region49: #{tpu_custom_call.1} parent=5 // pred_check
        _
      $region50: #{tpu_custom_call.1} parent=5 // pred_check_branch
        %592 = sbr.rel (%p589) target = $region52
      $region51: #{tpu_custom_call.1} parent=5 // pred_region
        %s593 = ssub.s32 %s30, 1
        // Predicated region
        $region53: #{tpu_custom_call.1} parent=51 // pred_check
          %p594 = pneg %p70
        $region54: #{tpu_custom_call.1} parent=51 // pred_check_branch
          %596 = sbr.rel (%p594) target = $region56
        $region55: #{tpu_custom_call.1} parent=51 // pred_region
          %598 = dma.done [#allocation5], 16
        $region56: #{tpu_custom_call.1} parent=51 // pred_fallthru
          _
        %s599 = sand.u32 %s87, 1
        %s600 = scalar_lea.sflag [#allocation3], %s599
        %s601 = sand.u32 %s87, 1
        %s602 = smul.addr %s601, 8
        %s603 = scalar_lea.vmem [#allocation6], %s602
        // Predicated region
        $region57: #{tpu_custom_call.1} parent=51 // pred_check
          %p604 = pneg %p100
        $region58: #{tpu_custom_call.1} parent=51 // pred_check_branch
          %606 = sbr.rel (%p604) target = $region60
        $region59: #{tpu_custom_call.1} parent=51 // pred_region
          %608 = dma.done %s600, 128
        $region60: #{tpu_custom_call.1} parent=51 // pred_fallthru
          _
        %s609 = sand.u32 %s35, 1
        %s610 = scalar_lea.sflag [#allocation8], %s609
        %s611 = sand.u32 %s117, 1
        %s612 = smul.addr %s611, 8
        %s613 = scalar_lea.vmem [#allocation7], %s612
        // Predicated region
        $region61: #{tpu_custom_call.1} parent=51 // pred_check
          %p614 = pneg %p130
        $region62: #{tpu_custom_call.1} parent=51 // pred_check_branch
          %616 = sbr.rel (%p614) target = $region64
        $region63: #{tpu_custom_call.1} parent=51 // pred_region
          %618 = dma.done %s610, 128
        $region64: #{tpu_custom_call.1} parent=51 // pred_fallthru
          _
        %s619 = sand.u32 %s35, 1
        %s620 = scalar_lea.sflag [#allocation8], %s619
        %s621 = sand.u32 %s147, 1
        %s622 = smul.addr %s621, 24
        %s623 = scalar_lea.vmem [#allocation9], %s622
        // Predicated region
        $region65: #{tpu_custom_call.1} parent=51 // pred_check
          %p624 = pneg %p160
        $region66: #{tpu_custom_call.1} parent=51 // pred_check_branch
          %626 = sbr.rel (%p624) target = $region68
        $region67: #{tpu_custom_call.1} parent=51 // pred_region
          %628 = dma.done %s620, 384
        $region68: #{tpu_custom_call.1} parent=51 // pred_fallthru
          _
        %s629 = sand.u32 %s35, 1
        %s630 = scalar_lea.sflag [#allocation11], %s629
        %s631 = sand.u32 %s177, 1
        %s632 = smul.addr %s631, 24
        %s633 = scalar_lea.vmem [#allocation10], %s632
        // Predicated region
        $region69: #{tpu_custom_call.1} parent=51 // pred_check
          %p634 = pneg %p190
        $region70: #{tpu_custom_call.1} parent=51 // pred_check_branch
          %636 = sbr.rel (%p634) target = $region72
        $region71: #{tpu_custom_call.1} parent=51 // pred_region
          %638 = dma.done %s630, 384
        $region72: #{tpu_custom_call.1} parent=51 // pred_fallthru
          _
        %s639 = sand.u32 %s35, 1
        %s640 = scalar_lea.sflag [#allocation11], %s639
        %s641 = sand.u32 %s207, 1
        %s642 = smul.addr %s641, 8
        %s643 = scalar_lea.vmem [#allocation12], %s642
        // Predicated region
        $region73: #{tpu_custom_call.1} parent=51 // pred_check
          %p644 = pneg %p220
        $region74: #{tpu_custom_call.1} parent=51 // pred_check_branch
          %646 = sbr.rel (%p644) target = $region76
        $region75: #{tpu_custom_call.1} parent=51 // pred_region
          %648 = dma.done %s640, 128
        $region76: #{tpu_custom_call.1} parent=51 // pred_fallthru
          _
        %s649 = sand.u32 %s35, 1
        %s650 = scalar_lea.sflag [#allocation14], %s649
        %s651 = sand.u32 %s237, 1
        %s652 = smul.addr %s651, 64
        %s653 = scalar_lea.vmem [#allocation13], %s652
        // Predicated region
        $region77: #{tpu_custom_call.1} parent=51 // pred_check
          %p654 = pneg %p250
        $region78: #{tpu_custom_call.1} parent=51 // pred_check_branch
          %656 = sbr.rel (%p654) target = $region80
        $region79: #{tpu_custom_call.1} parent=51 // pred_region
          %658 = dma.done %s650, 1024
        $region80: #{tpu_custom_call.1} parent=51 // pred_fallthru
          _
        %s659 = sand.u32 %s35, 1
        %s660 = scalar_lea.sflag [#allocation14], %s659
        %s661 = sand.u32 %s267, 1
        %s662 = smul.addr %s661, 16
        %s663 = scalar_lea.vmem [#allocation15], %s662
        // Predicated region
        $region81: #{tpu_custom_call.1} parent=51 // pred_check
          %p664 = pneg %p280
        $region82: #{tpu_custom_call.1} parent=51 // pred_check_branch
          %666 = sbr.rel (%p664) target = $region84
        $region83: #{tpu_custom_call.1} parent=51 // pred_region
          %668 = dma.done %s660, 256
        $region84: #{tpu_custom_call.1} parent=51 // pred_fallthru
          _
        %669 = sfence
        %p670 = pneg %p70
        %p671 = pneg %p67
        %s672 = sand.u32 %s87, 1
        %s673 = scalar_lea.sflag [#allocation3], %s672
        %s674 = sand.u32 %s87, 1
        %s675 = smul.addr %s674, 8
        %s676 = scalar_lea.vmem [#allocation6], %s675
        %p677 = pneg %p100
        %p678 = pneg %p97
        %s679 = sand.u32 %s35, 1
        %s680 = scalar_lea.sflag [#allocation8], %s679
        %s681 = sand.u32 %s117, 1
        %s682 = smul.addr %s681, 8
        %s683 = scalar_lea.vmem [#allocation7], %s682
        %p684 = pneg %p130
        %p685 = pneg %p127
        %s686 = sand.u32 %s35, 1
        %s687 = scalar_lea.sflag [#allocation8], %s686
        %s688 = sand.u32 %s147, 1
        %s689 = smul.addr %s688, 24
        %s690 = scalar_lea.vmem [#allocation9], %s689
        %p691 = pneg %p160
        %p692 = pneg %p157
        %s693 = sand.u32 %s35, 1
        %s694 = scalar_lea.sflag [#allocation11], %s693
        %s695 = sand.u32 %s177, 1
        %s696 = smul.addr %s695, 24
        %s697 = scalar_lea.vmem [#allocation10], %s696
        %p698 = pneg %p190
        %p699 = pneg %p187
        %s700 = sand.u32 %s35, 1
        %s701 = scalar_lea.sflag [#allocation11], %s700
        %s702 = sand.u32 %s207, 1
        %s703 = smul.addr %s702, 8
        %s704 = scalar_lea.vmem [#allocation12], %s703
        %p705 = pneg %p220
        %p706 = pneg %p217
        %s707 = sand.u32 %s35, 1
        %s708 = scalar_lea.sflag [#allocation14], %s707
        %s709 = sand.u32 %s237, 1
        %s710 = smul.addr %s709, 64
        %s711 = scalar_lea.vmem [#allocation13], %s710
        %p712 = pneg %p250
        %p713 = pneg %p247
        %s714 = sand.u32 %s35, 1
        %s715 = scalar_lea.sflag [#allocation14], %s714
        %s716 = sand.u32 %s267, 1
        %s717 = smul.addr %s716, 16
        %s718 = scalar_lea.vmem [#allocation15], %s717
        %p719 = pneg %p280
        %p720 = pneg %p277
        %p721 = pneg %p308
        %p722 = pneg %p305
        %s723 = sand.u32 %s295, 1
        %s724 = scalar_lea.sflag [#allocation4], %s723
        %s725 = sand.u32 %s295, 1
        %s726 = smul.addr %s725, 8
        %s727 = scalar_lea.vmem [#allocation16], %s726
        %s728 = sadd.s32 %s41, %s42
        %s729 = smul.u32 2, %s728
        %s730 = sadd.s32 %s41, %s42
        %s731 = smul.u32 2, %s730
        %s732 = sadd.s32 %s41, %s42
        %s733 = smul.u32 2, %s732
        %s734 = sadd.s32 %s41, %s42
        %s735 = smul.u32 2, %s734
        %s736 = sadd.s32 %s41, %s42
        %s737 = smul.u32 2, %s736
        %s738 = sadd.s32 %s41, %s42
        %s739 = smul.u32 2, %s738
        %s740 = sadd.s32 %s41, %s42
        %s741 = smul.u32 2, %s740
        %s742 = sld [smem:[#allocation2]]
        %s743 = sld [smem:[#allocation2 + $0x1]]
        %v744 = vld [vmem:[%s613] sm:$0xf]
        %v745 = vld [vmem:[%s613 + $0x4] sm:$0xf]
        %v746 = vunpack.c.l.bf16 %v744
        %v747 = vunpack.c.l.bf16 %v745
        %v748 = vld [vmem:[%s603] sm:$0xf]
        %v749 = vld [vmem:[%s603 + $0x4] sm:$0xf]
        %v750 = vunpack.c.l.bf16 %v748
        %v751 = vunpack.c.l.bf16 %v749
        %vm752 = vcmp.gt.f32.partialorder %v746, 0.0
        %vm753 = vcmp.gt.f32.partialorder %v747, 0.0
        %v754 = vsel %vm752, 1, 0
        %v755 = vsel %vm753, 1, 0
        %v756 = vcvt.s32.f32 %v754
        %v757 = vcvt.s32.f32 %v755
        %v758 = vsub.f32 %v746, %v750
        %v759 = vsub.f32 %v747, %v751
        %v760 = vand.u32 2147483647, %v758
        %v761 = vand.u32 2147483647, %v759
        %v762 = vmul.f32 %v760, %v756
        %v763 = vmul.f32 %v761, %v757
        %v764 = vstv %s742
        %vm765 = vcmp.le.f32.partialorder %v762, %v764
        %vm766 = vcmp.le.f32.partialorder %v763, %v764
        %v767 = vmul.f32 %v762, %v762
        %v768 = vmul.f32 %v763, %v763
        %s769 = smul.f32 %s742, %s742
        %v770 = vstv %s769
        %v771 = vadd.f32 %v767, %v770
        %v772 = vadd.f32 %v768, %v770
        %v773 = vstv %s743
        %v774 = vmul.f32 %v771, %v773
        %v775 = vmul.f32 %v772, %v773
        %v776 = vsel %vm765, %v762, %v774
        %v777 = vsel %vm766, %v763, %v775
        %v778 = vld [vmem:[%s623] sm:$0xf]
        %v779 = vld [vmem:[%s623 + $0x4] sm:$0xf]
        %v780 = vunpack.c.l.bf16 %v778
        %v781 = vunpack.c.l.bf16 %v779
        %s782 = scalar_lea.vmem %s623, 8 [#allocation9]
        %v783 = vld [vmem:[%s782] sm:$0xf]
        %v784 = vld [vmem:[%s782 + $0x4] sm:$0xf]
        %v785 = vunpack.c.l.bf16 %v783
        %v786 = vunpack.c.l.bf16 %v784
        %s787 = scalar_lea.vmem %s623, 16 [#allocation9]
        %v788 = vld [vmem:[%s787] sm:$0xf]
        %v789 = vld [vmem:[%s787 + $0x4] sm:$0xf]
        %v790 = vunpack.c.l.bf16 %v788
        %v791 = vunpack.c.l.bf16 %v789
        %v792 = vld [vmem:[%s633] sm:$0xf]
        %v793 = vld [vmem:[%s633 + $0x4] sm:$0xf]
        %v794 = vunpack.c.l.bf16 %v792
        %v795 = vunpack.c.l.bf16 %v793
        %s796 = scalar_lea.vmem %s633, 8 [#allocation10]
        %v797 = vld [vmem:[%s796] sm:$0xf]
        %v798 = vld [vmem:[%s796 + $0x4] sm:$0xf]
        %v799 = vunpack.c.l.bf16 %v797
        %v800 = vunpack.c.l.bf16 %v798
        %s801 = scalar_lea.vmem %s633, 16 [#allocation10]
        %v802 = vld [vmem:[%s801] sm:$0xf]
        %v803 = vld [vmem:[%s801 + $0x4] sm:$0xf]
        %v804 = vunpack.c.l.bf16 %v802
        %v805 = vunpack.c.l.bf16 %v803
        %v806 = vld [vmem:[%s643] sm:$0xf]
        %v807 = vld [vmem:[%s643 + $0x4] sm:$0xf]
        %v808 = vunpack.c.l.bf16 %v806
        %v809 = vunpack.c.l.bf16 %v807
        %v810 = vmul.f32 %v780, %v780
        %v811 = vmul.f32 %v781, %v781
        %v812 = vmul.f32 %v785, %v785
        %v813 = vmul.f32 %v786, %v786
        %v814 = vadd.f32 %v810, %v812
        %v815 = vadd.f32 %v811, %v813
        %v816 = vmul.f32 %v790, %v790
        %v817 = vmul.f32 %v791, %v791
        %v818 = vadd.f32 %v814, %v816
        %v819 = vadd.f32 %v815, %v817
        %v820 = vadd.f32 %v818, 1e-12
        %v821 = vadd.f32 %v819, 1e-12
        %v822 = vrsqrt.pop %v820
        %v823 = vmul.f32 %v822, %v820
        %v824 = vmul.f32 %v823, %v822
        %v825 = vmul.f32 0.5, %v824
        %v826 = vsub.f32 1.5, %v825
        %v827 = vmul.f32 %v822, %v826
        %vm828 = vweird.f32 %v820
        %vm829 = vweird.f32 %v822
        %vm830 = vmor %vm828, %vm829
        %v831 = vsel %vm830, %v822, %v827
        %v832 = vrsqrt.pop %v821
        %v833 = vmul.f32 %v832, %v821
        %v834 = vmul.f32 %v833, %v832
        %v835 = vmul.f32 0.5, %v834
        %v836 = vsub.f32 1.5, %v835
        %v837 = vmul.f32 %v832, %v836
        %vm838 = vweird.f32 %v821
        %vm839 = vweird.f32 %v832
        %vm840 = vmor %vm838, %vm839
        %v841 = vsel %vm840, %v832, %v837
        %v842 = vmul.f32 %v794, %v794
        %v843 = vmul.f32 %v795, %v795
        %v844 = vmul.f32 %v799, %v799
        %v845 = vmul.f32 %v800, %v800
        %v846 = vadd.f32 %v842, %v844
        %v847 = vadd.f32 %v843, %v845
        %v848 = vmul.f32 %v804, %v804
        %v849 = vmul.f32 %v805, %v805
        %v850 = vadd.f32 %v846, %v848
        %v851 = vadd.f32 %v847, %v849
        %v852 = vadd.f32 %v850, 1e-12
        %v853 = vadd.f32 %v851, 1e-12
        %v854 = vrsqrt.pop %v852
        %v855 = vmul.f32 %v854, %v852
        %v856 = vmul.f32 %v855, %v854
        %v857 = vmul.f32 0.5, %v856
        %v858 = vsub.f32 1.5, %v857
        %v859 = vmul.f32 %v854, %v858
        %vm860 = vweird.f32 %v852
        %vm861 = vweird.f32 %v854
        %vm862 = vmor %vm860, %vm861
        %v863 = vsel %vm862, %v854, %v859
        %v864 = vrsqrt.pop %v853
        %v865 = vmul.f32 %v864, %v853
        %v866 = vmul.f32 %v865, %v864
        %v867 = vmul.f32 0.5, %v866
        %v868 = vsub.f32 1.5, %v867
        %v869 = vmul.f32 %v864, %v868
        %vm870 = vweird.f32 %v853
        %vm871 = vweird.f32 %v864
        %vm872 = vmor %vm870, %vm871
        %v873 = vsel %vm872, %v864, %v869
        %v874 = vmul.f32 %v780, %v794
        %v875 = vmul.f32 %v781, %v795
        %v876 = vmul.f32 %v785, %v799
        %v877 = vmul.f32 %v786, %v800
        %v878 = vadd.f32 %v874, %v876
        %v879 = vadd.f32 %v875, %v877
        %v880 = vmul.f32 %v790, %v804
        %v881 = vmul.f32 %v791, %v805
        %v882 = vadd.f32 %v878, %v880
        %v883 = vadd.f32 %v879, %v881
        %v884 = vmul.f32 %v882, %v831
        %v885 = vmul.f32 %v883, %v841
        %v886 = vmul.f32 %v884, %v863
        %v887 = vmul.f32 %v885, %v873
        %v888 = vmax.f32 %v886, -1.0
        %v889 = vmax.f32 %v887, -1.0
        %v890 = vmin.f32 %v888, 1.0
        %v891 = vmin.f32 %v889, 1.0
        %v892 = vsub.f32 1.0, %v890
        %v893 = vsub.f32 1.0, %v891
        %v894 = vmul.f32 %v892, %v808
        %v895 = vmul.f32 %v893, %v809
        %v896 = vld [vmem:[%s663] sm:$0xff]
        %v897 = vld [vmem:[%s663 + $0x8] sm:$0xff]
        %vm898 = vcmp.ge.s32.totalorder %v896, 0
        %vm899 = vcmp.ge.s32.totalorder %v897, 0
        %v900 = vsel %vm898, 1, 0
        %v901 = vsel %vm899, 1, 0
        %v902 = vcvt.s32.f32 %v900
        %v903 = vcvt.s32.f32 %v901
        %v904 = vld [vmem:[%s653] sm:$0xf]
        %v905 = vld [vmem:[%s653 + $0x4] sm:$0xf]
        %v906 = vunpack.c.l.bf16 %v904
        %v907 = vunpack.c.l.bf16 %v905
        %s908 = scalar_lea.vmem %s653, 8 [#allocation13]
        %v909 = vld [vmem:[%s908] sm:$0xf]
        %v910 = vld [vmem:[%s908 + $0x4] sm:$0xf]
        %v911 = vunpack.c.l.bf16 %v909
        %v912 = vunpack.c.l.bf16 %v910
        %v913 = vmax.f32 %v906, %v911
        %v914 = vmax.f32 %v907, %v912
        %s915 = scalar_lea.vmem %s653, 16 [#allocation13]
        %v916 = vld [vmem:[%s915] sm:$0xf]
        %v917 = vld [vmem:[%s915 + $0x4] sm:$0xf]
        %v918 = vunpack.c.l.bf16 %v916
        %v919 = vunpack.c.l.bf16 %v917
        %s920 = scalar_lea.vmem %s653, 24 [#allocation13]
        %v921 = vld [vmem:[%s920] sm:$0xf]
        %v922 = vld [vmem:[%s920 + $0x4] sm:$0xf]
        %v923 = vunpack.c.l.bf16 %v921
        %v924 = vunpack.c.l.bf16 %v922
        %v925 = vmax.f32 %v918, %v923
        %v926 = vmax.f32 %v919, %v924
        %v927 = vmax.f32 %v913, %v925
        %v928 = vmax.f32 %v914, %v926
        %s929 = scalar_lea.vmem %s653, 32 [#allocation13]
        %v930 = vld [vmem:[%s929] sm:$0xf]
        %v931 = vld [vmem:[%s929 + $0x4] sm:$0xf]
        %v932 = vunpack.c.l.bf16 %v930
        %v933 = vunpack.c.l.bf16 %v931
        %s934 = scalar_lea.vmem %s653, 40 [#allocation13]
        %v935 = vld [vmem:[%s934] sm:$0xf]
        %v936 = vld [vmem:[%s934 + $0x4] sm:$0xf]
        %v937 = vunpack.c.l.bf16 %v935
        %v938 = vunpack.c.l.bf16 %v936
        %v939 = vmax.f32 %v932, %v937
        %v940 = vmax.f32 %v933, %v938
        %v941 = vmax.f32 %v927, %v939
        %v942 = vmax.f32 %v928, %v940
        %s943 = scalar_lea.vmem %s653, 48 [#allocation13]
        %v944 = vld [vmem:[%s943] sm:$0xf]
        %v945 = vld [vmem:[%s943 + $0x4] sm:$0xf]
        %v946 = vunpack.c.l.bf16 %v944
        %v947 = vunpack.c.l.bf16 %v945
        %s948 = scalar_lea.vmem %s653, 56 [#allocation13]
        %v949 = vld [vmem:[%s948] sm:$0xf]
        %v950 = vld [vmem:[%s948 + $0x4] sm:$0xf]
        %v951 = vunpack.c.l.bf16 %v949
        %v952 = vunpack.c.l.bf16 %v950
        %v953 = vmax.f32 %v946, %v951
        %v954 = vmax.f32 %v947, %v952
        %v955 = vmax.f32 %v941, %v953
        %v956 = vmax.f32 %v942, %v954
        %v957 = vsub.f32 %v906, %v955
        %v958 = vsub.f32 %v907, %v956
        %v959 = vmul.f32 %v957, 1.442695
        %v960 = vpow.pop %v959
        %v961 = vmul.f32 %v958, 1.442695
        %v962 = vpow.pop %v961
        %v963 = vadd.f32 %v960, 0.0
        %v964 = vadd.f32 %v962, 0.0
        %vm965 = vcmp.eq.s32.totalorder %v896, 0
        %vm966 = vcmp.eq.s32.totalorder %v897, 0
        %v967 = vsel %vm965, %v906, 0.0
        %v968 = vsel %vm966, %v907, 0.0
        %v969 = vadd.f32 %v967, 0.0
        %v970 = vadd.f32 %v968, 0.0
        %v971 = vsub.f32 %v911, %v955
        %v972 = vsub.f32 %v912, %v956
        %v973 = vmul.f32 %v971, 1.442695
        %v974 = vpow.pop %v973
        %v975 = vmul.f32 %v972, 1.442695
        %v976 = vpow.pop %v975
        %v977 = vadd.f32 %v963, %v974
        %v978 = vadd.f32 %v964, %v976
        %vm979 = vcmp.eq.s32.totalorder %v896, 1
        %vm980 = vcmp.eq.s32.totalorder %v897, 1
        %v981 = vsel %vm979, %v911, 0.0
        %v982 = vsel %vm980, %v912, 0.0
        %v983 = vadd.f32 %v969, %v981
        %v984 = vadd.f32 %v970, %v982
        %v985 = vsub.f32 %v918, %v955
        %v986 = vsub.f32 %v919, %v956
        %v987 = vmul.f32 %v985, 1.442695
        %v988 = vpow.pop %v987
        %v989 = vmul.f32 %v986, 1.442695
        %v990 = vpow.pop %v989
        %v991 = vadd.f32 %v977, %v988
        %v992 = vadd.f32 %v978, %v990
        %vm993 = vcmp.eq.s32.totalorder %v896, 2
        %vm994 = vcmp.eq.s32.totalorder %v897, 2
        %v995 = vsel %vm993, %v918, 0.0
        %v996 = vsel %vm994, %v919, 0.0
        %v997 = vadd.f32 %v983, %v995
        %v998 = vadd.f32 %v984, %v996
        %v999 = vsub.f32 %v923, %v955
        %v1000 = vsub.f32 %v924, %v956
        %v1001 = vmul.f32 %v999, 1.442695
        %v1002 = vpow.pop %v1001
        %v1003 = vmul.f32 %v1000, 1.442695
        %v1004 = vpow.pop %v1003
        %v1005 = vadd.f32 %v991, %v1002
        %v1006 = vadd.f32 %v992, %v1004
        %vm1007 = vcmp.eq.s32.totalorder %v896, 3
        %vm1008 = vcmp.eq.s32.totalorder %v897, 3
        %v1009 = vsel %vm1007, %v923, 0.0
        %v1010 = vsel %vm1008, %v924, 0.0
        %v1011 = vadd.f32 %v997, %v1009
        %v1012 = vadd.f32 %v998, %v1010
        %v1013 = vsub.f32 %v932, %v955
        %v1014 = vsub.f32 %v933, %v956
        %v1015 = vmul.f32 %v1013, 1.442695
        %v1016 = vpow.pop %v1015
        %v1017 = vmul.f32 %v1014, 1.442695
        %v1018 = vpow.pop %v1017
        %v1019 = vadd.f32 %v1005, %v1016
        %v1020 = vadd.f32 %v1006, %v1018
        %vm1021 = vcmp.eq.s32.totalorder %v896, 4
        %vm1022 = vcmp.eq.s32.totalorder %v897, 4
        %v1023 = vsel %vm1021, %v932, 0.0
        %v1024 = vsel %vm1022, %v933, 0.0
        %v1025 = vadd.f32 %v1011, %v1023
        %v1026 = vadd.f32 %v1012, %v1024
        %v1027 = vsub.f32 %v937, %v955
        %v1028 = vsub.f32 %v938, %v956
        %v1029 = vmul.f32 %v1027, 1.442695
        %v1030 = vpow.pop %v1029
        %v1031 = vmul.f32 %v1028, 1.442695
        %v1032 = vpow.pop %v1031
        %v1033 = vadd.f32 %v1019, %v1030
        %v1034 = vadd.f32 %v1020, %v1032
        %vm1035 = vcmp.eq.s32.totalorder %v896, 5
        %vm1036 = vcmp.eq.s32.totalorder %v897, 5
        %v1037 = vsel %vm1035, %v937, 0.0
        %v1038 = vsel %vm1036, %v938, 0.0
        %v1039 = vadd.f32 %v1025, %v1037
        %v1040 = vadd.f32 %v1026, %v1038
        %v1041 = vsub.f32 %v946, %v955
        %v1042 = vsub.f32 %v947, %v956
        %v1043 = vmul.f32 %v1041, 1.442695
        %v1044 = vpow.pop %v1043
        %v1045 = vmul.f32 %v1042, 1.442695
        %v1046 = vpow.pop %v1045
        %v1047 = vadd.f32 %v1033, %v1044
        %v1048 = vadd.f32 %v1034, %v1046
        %vm1049 = vcmp.eq.s32.totalorder %v896, 6
        %vm1050 = vcmp.eq.s32.totalorder %v897, 6
        %v1051 = vsel %vm1049, %v946, 0.0
        %v1052 = vsel %vm1050, %v947, 0.0
        %v1053 = vadd.f32 %v1039, %v1051
        %v1054 = vadd.f32 %v1040, %v1052
        %v1055 = vsub.f32 %v951, %v955
        %v1056 = vsub.f32 %v952, %v956
        %v1057 = vmul.f32 %v1055, 1.442695
        %v1058 = vpow.pop %v1057
        %v1059 = vmul.f32 %v1056, 1.442695
        %v1060 = vpow.pop %v1059
        %v1061 = vadd.f32 %v1047, %v1058
        %v1062 = vadd.f32 %v1048, %v1060
        %vm1063 = vcmp.eq.s32.totalorder %v896, 7
        %vm1064 = vcmp.eq.s32.totalorder %v897, 7
        %v1065 = vsel %vm1063, %v951, 0.0
        %v1066 = vsel %vm1064, %v952, 0.0
        %v1067 = vadd.f32 %v1053, %v1065
        %v1068 = vadd.f32 %v1054, %v1066
        %v1069 = vlog2.pop %v1061
        %v1070 = vmul.f32 %v1069, 0.6931472
        %v1071 = vlog2.pop %v1062
        %v1072 = vmul.f32 %v1071, 0.6931472
        %v1073 = vadd.f32 %v1070, %v955
        %v1074 = vadd.f32 %v1072, %v956
        %v1075 = vsub.f32 %v1073, %v1067
        %v1076 = vsub.f32 %v1074, %v1068
        %v1077 = vmul.f32 %v1075, %v902
        %v1078 = vmul.f32 %v1076, %v903
        %v1079 = vadd.f32 %v776, %v777
        %v1080 = vrot.slane %v1079, 4
        %v1081 = vadd.f32 %v1079, %v1080
        %v1082 = vrot.slane %v1081, 2
        %v1083 = vadd.f32 %v1081, %v1082
        %v1084 = vrot.slane %v1083, 1
        %v1085 = vadd.f32 %v1083, %v1084
        %v1086 = vadd.f32 %v756, %v757
        %v1087 = vrot.slane %v1086, 4
        %v1088 = vadd.f32 %v1086, %v1087
        %v1089 = vrot.slane %v1088, 2
        %v1090 = vadd.f32 %v1088, %v1089
        %v1091 = vrot.slane %v1090, 1
        %v1092 = vadd.f32 %v1090, %v1091
        %v1093 = vadd.f32 %v894, %v895
        %v1094 = vrot.slane %v1093, 4
        %v1095 = vadd.f32 %v1093, %v1094
        %v1096 = vrot.slane %v1095, 2
        %v1097 = vadd.f32 %v1095, %v1096
        %v1098 = vrot.slane %v1097, 1
        %v1099 = vadd.f32 %v1097, %v1098
        %v1100 = vadd.f32 %v808, %v809
        %v1101 = vrot.slane %v1100, 4
        %v1102 = vadd.f32 %v1100, %v1101
        %v1103 = vrot.slane %v1102, 2
        %v1104 = vadd.f32 %v1102, %v1103
        %v1105 = vrot.slane %v1104, 1
        %v1106 = vadd.f32 %v1104, %v1105
        %v1107 = vadd.f32 %v1077, %v1078
        %v1108 = vrot.slane %v1107, 4
        %v1109 = vadd.f32 %v1107, %v1108
        %v1110 = vrot.slane %v1109, 2
        %v1111 = vadd.f32 %v1109, %v1110
        %v1112 = vrot.slane %v1111, 1
        %v1113 = vadd.f32 %v1111, %v1112
        %v1114 = vadd.f32 %v902, %v903
        %v1115 = vrot.slane %v1114, 4
        %v1116 = vadd.f32 %v1114, %v1115
        %v1117 = vrot.slane %v1116, 2
        %v1118 = vadd.f32 %v1116, %v1117
        %v1119 = vrot.slane %v1118, 1
        %v1120 = vadd.f32 %v1118, %v1119
        %vm1121 = vcmask 1040384
        %v1122 = vsel %vm1121, %v1085, %v1092
        %vm1123 = vcmask 1041408
        %v1124 = vsel %vm1123, %v1122, %v1099
        %vm1125 = vcmask 1042432
        %v1126 = vsel %vm1125, %v1124, %v1106
        %vm1127 = vcmask 1043456
        %v1128 = vsel %vm1127, %v1126, %v1113
        %vm1129 = vcmask 1044480
        %v1130 = vsel %vm1129, %v1128, %v1120
        %vm1131 = vcmask 1045504
        %v1132 = vsel %vm1131, %v1130, 0.0
        %p1133 = scmp.eq.s32.totalorder %s42, 0
        // Predicated region
        $region85: #{tpu_custom_call.1} parent=51 // pred_check
          %p1134 = pneg %p1133
        $region86: #{tpu_custom_call.1} parent=51 // pred_check_branch
          %1136 = sbr.rel (%p1134) target = $region88
        $region87: #{tpu_custom_call.1} parent=51 // pred_region
          %1137 = vst [vmem:[%s727] sm:$0xff] 0.0
        $region88: #{tpu_custom_call.1} parent=51 // pred_fallthru
          _
        %v1138 = vld [vmem:[%s727] sm:$0xff]
        %v1139 = vadd.f32 %v1138, %v1132
        %1140 = vst [vmem:[%s727] sm:$0xff] %v1139
        %s1141 = sand.u32 %s295, 1
        %s1142 = scalar_lea.sflag [#allocation4], %s1141
        %s1143 = sand.u32 %s295, 1
        %s1144 = smul.addr %s1143, 8
        %s1145 = scalar_lea.vmem [#allocation16], %s1144
        // Predicated region
        $region89: #{tpu_custom_call.1} parent=51 // pred_check
          %p1146 = pneg %p305
        $region90: #{tpu_custom_call.1} parent=51 // pred_check_branch
          %1148 = sbr.rel (%p1146) target = $region92
        $region91: #{tpu_custom_call.1} parent=51 // pred_region
          %1150 = vsyncadd %s1142, 0
          %s1151 = smul.addr %s40, 2
          %s1152 = sadd.s32 %s41, %s1151
          %s1153 = smul.addr %s1152, 8
          %s1154 = scalar_lea.hbm %s8, %s1153
          %s1156 = sshll.u32 %s1145, 4
          %s1157 = int_to_ptr.vmem [resolvable:$true] %s1156
          %s1158 = sshll.u32 %s1154, 4
          %s1159 = int_to_ptr.hbm [resolvable:$true] %s1158
          %1161 = dma.vmem_to_hbm [thread:$0]  %s1157, 128, %s1159, %s1142
        $region92: #{tpu_custom_call.1} parent=51 // pred_fallthru
          _
      $region52: #{tpu_custom_call.1} parent=5 // pred_fallthru
        _
      %p1162 = scmp.le.s32.totalorder 2, %s30
      // Predicated region
      $region93: #{tpu_custom_call.1} parent=5 // pred_check
        %p1163 = pneg %p1162
      $region94: #{tpu_custom_call.1} parent=5 // pred_check_branch
        %1165 = sbr.rel (%p1163) target = $region96
      $region95: #{tpu_custom_call.1} parent=5 // pred_region
        %s1166 = ssub.s32 %s30, 2
        // Predicated region
        $region97: #{tpu_custom_call.1} parent=95 // pred_check
          %p1167 = pneg %p311
        $region98: #{tpu_custom_call.1} parent=95 // pred_check_branch
          %1169 = sbr.rel (%p1167) target = $region100
        $region99: #{tpu_custom_call.1} parent=95 // pred_region
          %s1170 = sand.u32 %s296, 1
          %s1171 = scalar_lea.sflag [#allocation4], %s1170
          %s1172 = sand.u32 %s296, 1
          %s1173 = smul.addr %s1172, 8
          %s1174 = scalar_lea.vmem [#allocation16], %s1173
          %1176 = dma.done %s1171, 128
        $region100: #{tpu_custom_call.1} parent=95 // pred_fallthru
          _
      $region96: #{tpu_custom_call.1} parent=5 // pred_fallthru
        _
    $region6: #{tpu_custom_call.1} parent=1 // loop_footer
      %s34 = sadd.s32 1, %s30
    $region7: #{tpu_custom_call.1} parent=1 // loop_footer_branch
      %29 = sbr.rel target = $region3
    $region8: #{tpu_custom_call.1} parent=1 // loop_exit
      _
    %1177 = vsyncpa [#allocation3], 1
    %s1178 = scalar_lea.sflag [#allocation3], 1
    %1179 = vsyncpa %s1178, 1
    %1180 = vsyncpa [#allocation8], 1
    %s1181 = scalar_lea.sflag [#allocation8], 1
    %1182 = vsyncpa %s1181, 1
    %1183 = vsyncpa [#allocation11], 1
    %s1184 = scalar_lea.sflag [#allocation11], 1
    %1185 = vsyncpa %s1184, 1
    %1186 = vsyncpa [#allocation14], 1
    %s1187 = scalar_lea.sflag [#allocation14], 1
    %1188 = vsyncpa %s1187, 1
    %1189 = vsyncpa [#allocation4], 1
    %s1190 = scalar_lea.sflag [#allocation4], 1
    %1191 = vsyncpa %s1190, 1
    %1192 = vsyncpa [#allocation5], 1
    %s1193 = scalar_lea.sflag [#allocation5], 1
    %1194 = vsyncpa %s1193, 1

</llo_original>
